<compile_context>
chip_gen: v5e
topology: v5e:2x2
jax: 0.10.0
libtpu: 0.0.40
codegen_flags: <defaults>
</compile_context>

<pallas_src>
import functools

import jax
import jax.numpy as jnp
from jax.experimental import pallas as pl
from jax.experimental.pallas import tpu as pltpu

BN_EPS = 1e-5


# ------------------------------ fused kernel --------------------------------

def _make_fused_kernel(num_taps, tile_t, apply_relu, has_residual, emit_stats,
                       compute_dtype):
    """BN-affine -> (ReLU) -> left-padded causal Conv1d -> +bias -> (+residual),
    plus optional per-(b) partial BN stats of the output.

    Tap j multiplies h[t - (num_taps-1-j)] (zero left-pad => causal conv,
    exactly F.pad(x, (K-1, 0)) + Conv1d). Tap shifts are realized with
    pltpu.roll + a carry of the previous T-tile's last K-1 rows of h.
    """

    def kernel(*refs):
        x_ref, aff_ref, w_ref, b_ref = refs[0], refs[1], refs[2], refs[3]
        idx = 4
        res_ref = None
        if has_residual:
            res_ref = refs[idx]; idx += 1
        o_ref = refs[idx]; idx += 1
        stats_ref = None
        if emit_stats:
            stats_ref = refs[idx]; idx += 1
        carry_ref = refs[idx] if num_taps > 1 else None

        t = pl.program_id(1)

        # Causal left-pad: zero the carried halo at the start of each batch row.
        if num_taps > 1:
            @pl.when(t == 0)
            def _():
                carry_ref[...] = jnp.zeros_like(carry_ref)

        # BatchNorm as per-channel affine map, then ReLU (f32 on the VPU).
        x = x_ref[0].astype(jnp.float32)                       # (tile_t, C_in)
        scale = aff_ref[pl.ds(0, 1), :]                        # (1, C_in)
        shift = aff_ref[pl.ds(1, 1), :]                        # (1, C_in)
        h = x * scale + shift
        if apply_relu:
            h = jnp.maximum(h, 0.0)

        c_out = b_ref.shape[-1]
        acc = jnp.zeros((tile_t, c_out), jnp.float32)
        row = jax.lax.broadcasted_iota(jnp.int32, (tile_t, 1), 0)

        for j in range(num_taps):
            s = num_taps - 1 - j                               # temporal left-shift
            if s == 0:
                hj = h
            else:
                # XLU rotate (no VMEM copy); fix the wrapped first s rows with
                # the previous tile's carried rows (zeros at t == 0).
                hj = pltpu.roll(h, shift=s, axis=0)
                for r in range(s):
                    prev_row = carry_ref[pl.ds(num_taps - 1 - s + r, 1), :]
                    hj = jnp.where(row == r,
                                   jnp.broadcast_to(prev_row, hj.shape), hj)
            # bf16 operands to the MXU, f32 accumulation.
            acc += jnp.dot(hj.astype(compute_dtype), w_ref[j],
                           preferred_element_type=jnp.float32)

        acc += b_ref[...]                                      # (1, C_out) bcast
        if has_residual:
            acc += res_ref[0].astype(jnp.float32)

        o_ref[0] = acc.astype(o_ref.dtype)

        # Partial BatchNorm statistics of this layer's output (f32, per batch
        # row, accumulated over the T tiles -> resident output accumulator).
        if emit_stats:
            @pl.when(t == 0)
            def _():
                stats_ref[...] = jnp.zeros_like(stats_ref)
            psum = jnp.sum(acc, axis=0, keepdims=True)         # (1, C_out)
            psq = jnp.sum(acc * acc, axis=0, keepdims=True)    # (1, C_out)
            stats_ref[0] = stats_ref[0] + jnp.concatenate([psum, psq], axis=0)

        # Carry the last K-1 rows of h (post-BN/ReLU) for the next T tile.
        if num_taps > 1:
            carry_ref[...] = h[tile_t - (num_taps - 1):, :]

    return kernel


def _choose_tile_t(T, C_in, C_out, K, has_res,
                   budget_bytes=12 * 1024 * 1024, max_tile=1024):
    """Largest T tile (multiple of 8, dividing T) that fits a conservative VMEM
    budget (keeps per-step working set well under v7x's 64 MiB / default scoped
    limits while leaving room for double-buffering and the weight block)."""
    if T <= 8 or T % 8 != 0:
        return T                                   # full-dim block is always legal
    row_bytes = 4 * (C_in + C_out + (C_out if has_res else 0)) * 2  # dbl-buffered blocks
    row_bytes += 4 * (C_in + 3 * C_out)                             # f32 temporaries
    cap = min(max_tile, max(8, budget_bytes // max(row_bytes, 1)))
    best = 8
    for d in range(8, T + 1, 8):
        if T % d == 0 and d <= cap:
            best = d
    return best


def fused_conv_block(x, scale, shift, weights, bias, *, apply_relu,
                     residual=None, emit_stats=False, tile_t=None,
                     compute_dtype=jnp.bfloat16):
    """x: (B, T, C_in) -> (B, T, C_out) [, stats (B, 2, C_out)].

    weights: stacked (K, C_in, C_out); tap j == torch Conv1d weight[:, :, j].T.
    Grid is (B, T/tile_t); B parallel (megacore), T arbitrary (halo carry +
    stats accumulation).
    """
    B, T, C_in = x.shape
    K, _, C_out = weights.shape
    has_res = residual is not None
    if tile_t is None:
        tile_t = _choose_tile_t(T, C_in, C_out, K, has_res)
    assert T % tile_t == 0 and (tile_t % 8 == 0 or tile_t == T)
    assert tile_t >= K
    n_t = T // tile_t

    kernel = _make_fused_kernel(K, tile_t, apply_relu, has_res, emit_stats,
                                compute_dtype)

    affine = jnp.stack([scale, shift]).astype(jnp.float32)       # (2, C_in)
    bias2d = bias.reshape(1, C_out).astype(jnp.float32)          # (1, C_out)
    w = weights.astype(compute_dtype)                            # (K, C_in, C_out)

    in_specs = [
        pl.BlockSpec((1, tile_t, C_in), lambda b, t: (b, t, 0)),   # x
        pl.BlockSpec((2, C_in), lambda b, t: (0, 0)),              # BN scale/shift
        pl.BlockSpec((K, C_in, C_out), lambda b, t: (0, 0, 0)),    # stacked taps
        pl.BlockSpec((1, C_out), lambda b, t: (0, 0)),             # conv bias
    ]
    inputs = [x, affine, w, bias2d]
    if has_res:
        in_specs.append(pl.BlockSpec((1, tile_t, C_out), lambda b, t: (b, t, 0)))
        inputs.append(residual)

    o_shape = jax.ShapeDtypeStruct((B, T, C_out), x.dtype)
    o_spec = pl.BlockSpec((1, tile_t, C_out), lambda b, t: (b, t, 0))
    if emit_stats:
        out_shape = (o_shape, jax.ShapeDtypeStruct((B, 2, C_out), jnp.float32))
        out_specs = (o_spec, pl.BlockSpec((1, 2, C_out), lambda b, t: (b, 0, 0)))
    else:
        out_shape, out_specs = o_shape, o_spec

    scratch = [pltpu.VMEM((K - 1, C_in), jnp.float32)] if K > 1 else []

    itemsize = jnp.dtype(x.dtype).itemsize
    bytes_accessed = (B * T * C_in * itemsize + B * T * C_out * itemsize
                      + (B * T * C_out * itemsize if has_res else 0)
                      + w.size * jnp.dtype(compute_dtype).itemsize
                      + affine.size * 4 + bias2d.size * 4
                      + (B * 2 * C_out * 4 if emit_stats else 0))
    cost = pl.CostEstimate(flops=2 * B * T * C_in * C_out * K,
                           transcendentals=0, bytes_accessed=bytes_accessed)

    result = pl.pallas_call(
        kernel,
        out_shape=out_shape,
        grid=(B, n_t),
        in_specs=in_specs,
        out_specs=out_specs,
        scratch_shapes=scratch,
        compiler_params=pltpu.CompilerParams(
            dimension_semantics=("parallel", "arbitrary"),
            vmem_limit_bytes=48 * 1024 * 1024),
        cost_estimate=cost,
    )(*inputs)

    return result if emit_stats else result


# ----------------------------- glue (plain JAX) -----------------------------

def _bn_from_stats(stats, gamma, beta, count):
    """Finalize training-mode BatchNorm1d from in-kernel partial stats.
    stats: (B, 2, C) with [sum, sum_of_squares] over T per batch row."""
    tot = jnp.sum(stats, axis=0)                  # (2, C)
    mean = tot[0] / count
    var = jnp.maximum(tot[1] / count - mean * mean, 0.0)   # biased variance
    scale = gamma * jax.lax.rsqrt(var + BN_EPS)
    shift = beta - mean * scale
    return scale, shift


def conv_model_forward(x, params, y=None, attention_mask=None, *, tile_t=None):
    B, T, dim = x.shape
    count = B * T
    ones = jnp.ones((dim,), jnp.float32)
    zeros = jnp.zeros((dim,), jnp.float32)

    # encoder[0]: LeftPadConv1d (no BN / ReLU in front); emit stats for bn1.
    h, stats = fused_conv_block(x, ones, zeros, params["in_conv"]["w"],
                                params["in_conv"]["bias"], apply_relu=False,
                                emit_stats=True, tile_t=tile_t)
    # ResBlocks
    for blk in params["blocks"]:
        shortcut = h
        s1, sh1 = _bn_from_stats(stats, *blk["bn1"], count)
        h, stats = fused_conv_block(h, s1, sh1, blk["conv1"]["w"],
                                    blk["conv1"]["bias"], apply_relu=True,
                                    emit_stats=True, tile_t=tile_t)
        s2, sh2 = _bn_from_stats(stats, *blk["bn2"], count)
        h, stats = fused_conv_block(h, s2, sh2, blk["conv2"]["w"],
                                    blk["conv2"]["bias"], apply_relu=True,
                                    residual=shortcut, emit_stats=True,
                                    tile_t=tile_t)
    # final BatchNorm -> ReLU -> Conv1d(kernel_size=1)
    sf, shf = _bn_from_stats(stats, *params["bn_out"], count)
    out = fused_conv_block(h, sf, shf, params["out_conv"]["w"],
                           params["out_conv"]["bias"], apply_relu=True,
                           emit_stats=False, tile_t=tile_t)
    # TODO(synk): optionally store inter-layer activations in bf16 if downstream
    # tolerates it (halves activation HBM traffic); kept f32 here for fidelity.

    loss = None
    if y is not None:
        per_elem = (out - y) ** 2                        # MSELoss(reduction='none')
        if attention_mask is not None:
            per_tok = per_elem.mean(axis=2) * attention_mask
            loss = per_tok.sum() / attention_mask.sum()
        else:
            loss = per_elem.mean()
    return out, loss


def init_params(key, dim, kernel_size, num_layers):
    def conv_params(k, ksize):
        kw, kb = jax.random.split(k)
        # w[j] == torch Conv1d weight[:, :, j].T, stacked as (K, C_in, C_out)
        w = 0.05 * jax.random.normal(kw, (ksize, dim, dim), jnp.float32)
        bias = 0.05 * jax.random.normal(kb, (dim,), jnp.float32)
        return {"w": w, "bias": bias}

    def bn_params(k):
        k1, k2 = jax.random.split(k)
        gamma = 1.0 + 0.1 * jax.random.normal(k1, (dim,), jnp.float32)
        beta = 0.1 * jax.random.normal(k2, (dim,), jnp.float32)
        return (gamma, beta)

    keys = jax.random.split(key, 2 + num_layers)
    params = {"in_conv": conv_params(keys[0], kernel_size), "blocks": []}
    for i in range(num_layers):
        k1, k2, k3, k4 = jax.random.split(keys[2 + i], 4)
        params["blocks"].append({
            "bn1": bn_params(k1), "conv1": conv_params(k2, kernel_size),
            "bn2": bn_params(k3), "conv2": conv_params(k4, kernel_size),
        })
    kf1, kf2 = jax.random.split(keys[1])
    params["bn_out"] = bn_params(kf1)
    params["out_conv"] = conv_params(kf2, 1)   # pointwise conv (kernel_size=1)
    return params


# --------------------------- pure-JAX reference -----------------------------

def _ref_conv(h, w, bias):
    K, T = w.shape[0], h.shape[1]
    hpad = jnp.pad(h, ((0, 0), (K - 1, 0), (0, 0)))
    acc = jnp.zeros(h.shape[:2] + (w.shape[2],), jnp.float32)
    for k in range(K):
        acc = acc + jnp.einsum("btc,cd->btd", hpad[:, k:k + T], w[k])
    return acc + bias


def _ref_bn_relu(h, gamma, beta):
    mean = jnp.mean(h, axis=(0, 1))
    var = jnp.mean((h - mean) ** 2, axis=(0, 1))
    scale = gamma / jnp.sqrt(var + BN_EPS)
    return jnp.maximum(h * scale + (beta - mean * scale), 0.0)


def reference_forward(x, params, y, attention_mask):
    h = _ref_conv(x, params["in_conv"]["w"], params["in_conv"]["bias"])
    for blk in params["blocks"]:
        sc = h
        h = _ref_conv(_ref_bn_relu(h, *blk["bn1"]),
                      blk["conv1"]["w"], blk["conv1"]["bias"])
        h = _ref_conv(_ref_bn_relu(h, *blk["bn2"]),
                      blk["conv2"]["w"], blk["conv2"]["bias"]) + sc
    h = _ref_bn_relu(h, *params["bn_out"])
    out = _ref_conv(h, params["out_conv"]["w"], params["out_conv"]["bias"])
    per_tok = ((out - y) ** 2).mean(axis=2) * attention_mask
    loss = per_tok.sum() / attention_mask.sum()
    return out, loss


if __name__ == "__main__":
    # Small but TPU-friendly shapes: lane-dense channels (128), T tiled 4x.
    B, T, DIM, K, LAYERS, TILE_T = 2, 128, 128, 2, 4, 32
    key = jax.random.PRNGKey(0)
    kx, ky, kp = jax.random.split(key, 3)
    x = jax.random.normal(kx, (B, T, DIM), jnp.float32)
    y = jax.random.normal(ky, (B, T, DIM), jnp.float32)
    attention_mask = jnp.concatenate(
        [jnp.ones((1, T), jnp.float32),
         jnp.concatenate([jnp.ones((1, T - 16), jnp.float32),
                          jnp.zeros((1, 16), jnp.float32)], axis=1)], axis=0)
    params = init_params(kp, DIM, K, LAYERS)

    fwd = jax.jit(functools.partial(conv_model_forward, tile_t=TILE_T))
    out, loss = fwd(x, params, y, attention_mask)
    (out, loss) = jax.block_until_ready((out, loss))

    ref_out, ref_loss = reference_forward(x, params, y, attention_mask)
    assert out.shape == (B, T, DIM) and loss.shape == ()
    # bf16 MXU operands (f32 accumulation) => slightly looser tolerance vs f32 ref.
    assert jnp.allclose(out, ref_out, atol=1e-1, rtol=1e-1), \
        float(jnp.max(jnp.abs(out - ref_out)))
    assert jnp.allclose(loss, ref_loss, atol=1e-1, rtol=1e-1), \
        (float(loss), float(ref_loss))
    print("KERNEL_OK")
</pallas_src>

<mosaic_0001>
module attributes {stable_mosaic.version = 11 : i64} {
  func.func @kernel(%arg0: i32, %arg1: i32, %arg2: memref<1x32x128xf32, #tpu.memory_space<vmem>>, %arg3: memref<2x128xf32, #tpu.memory_space<vmem>>, %arg4: memref<1x128x128xbf16, #tpu.memory_space<vmem>>, %arg5: memref<1x128xf32, #tpu.memory_space<vmem>>, %arg6: memref<1x32x128xf32, #tpu.memory_space<vmem>>) attributes {dimension_semantics = [#tpu.dimension_semantics<parallel>, #tpu.dimension_semantics<arbitrary>], iteration_bounds = array<i64: 2, 4>, scalar_prefetch = 0 : i64, scratch_operands = 0 : i64, tpu.core_type = #tpu.core_type<tc>, window_params = [{transform_indices = @transform_0, window_bounds = array<i64: 1, 32, 128>}, {pipeline_mode = #tpu.pipeline_mode<synchronous>, transform_indices = @transform_1, window_bounds = array<i64: 2, 128>}, {pipeline_mode = #tpu.pipeline_mode<synchronous>, transform_indices = @transform_2, window_bounds = array<i64: 1, 128, 128>}, {pipeline_mode = #tpu.pipeline_mode<synchronous>, transform_indices = @transform_3, window_bounds = array<i64: 1, 128>}, {transform_indices = @transform_4, window_bounds = array<i64: 1, 32, 128>}]} {
    %c0 = arith.constant 0 : index
    %c0_0 = arith.constant 0 : index
    %c0_1 = arith.constant 0 : index
    %0 = vector.load %arg2[%c0, %c0_0, %c0_1] : memref<1x32x128xf32, #tpu.memory_space<vmem>>, vector<1x32x128xf32>
    %1 = vector.shape_cast %0 : vector<1x32x128xf32> to vector<32x128xf32>
    %c0_2 = arith.constant 0 : index
    %c0_3 = arith.constant 0 : index
    %2 = vector.load %arg3[%c0_2, %c0_3] : memref<2x128xf32, #tpu.memory_space<vmem>>, vector<1x128xf32>
    %c1 = arith.constant 1 : index
    %c0_4 = arith.constant 0 : index
    %3 = vector.load %arg3[%c1, %c0_4] : memref<2x128xf32, #tpu.memory_space<vmem>>, vector<1x128xf32>
    %4 = vector.broadcast %2 : vector<1x128xf32> to vector<32x128xf32>
    %5 = arith.mulf %1, %4 : vector<32x128xf32>
    %6 = vector.broadcast %3 : vector<1x128xf32> to vector<32x128xf32>
    %7 = arith.addf %5, %6 : vector<32x128xf32>
    %cst = arith.constant 0.000000e+00 : f32
    %8 = vector.broadcast %cst : f32 to vector<32x128xf32>
    %9 = arith.maximumf %7, %8 : vector<32x128xf32>
    %cst_5 = arith.constant 0.000000e+00 : f32
    %10 = vector.broadcast %cst_5 : f32 to vector<32x128xf32>
    %11 = arith.truncf %9 : vector<32x128xf32> to vector<32x128xbf16>
    %c0_6 = arith.constant 0 : index
    %c0_7 = arith.constant 0 : index
    %c0_8 = arith.constant 0 : index
    %12 = vector.load %arg4[%c0_6, %c0_7, %c0_8] : memref<1x128x128xbf16, #tpu.memory_space<vmem>>, vector<1x128x128xbf16>
    %13 = vector.shape_cast %12 : vector<1x128x128xbf16> to vector<128x128xbf16>
    %cst_9 = arith.constant dense<0.000000e+00> : vector<32x128xf32>
    %14 = tpu.matmul %11, %13, %cst_9 {dimension_numbers = #tpu.dot_dimension_numbers<[1], [0], [0], [1], [0, 0, 1, 1], [], []>} : vector<32x128xbf16>, vector<128x128xbf16>, vector<32x128xf32> -> vector<32x128xf32>
    %15 = arith.addf %10, %14 : vector<32x128xf32>
    %c0_10 = arith.constant 0 : index
    %c0_11 = arith.constant 0 : index
    %16 = vector.load %arg5[%c0_10, %c0_11] : memref<1x128xf32, #tpu.memory_space<vmem>>, vector<1x128xf32>
    %17 = vector.broadcast %16 : vector<1x128xf32> to vector<32x128xf32>
    %18 = arith.addf %15, %17 : vector<32x128xf32>
    %c0_12 = arith.constant 0 : index
    %c0_13 = arith.constant 0 : index
    %c0_14 = arith.constant 0 : index
    %19 = vector.load %arg6[%c0_12, %c0_13, %c0_14] : memref<1x32x128xf32, #tpu.memory_space<vmem>>, vector<1x32x128xf32>
    %20 = vector.shape_cast %19 : vector<1x32x128xf32> to vector<32x128xf32>
    %21 = vector.shape_cast %18 : vector<32x128xf32> to vector<1x32x128xf32>
    tpu.vector_store %arg6[%c0_12, %c0_13, %c0_14], %21 {strides = array<i32>} : memref<1x32x128xf32, #tpu.memory_space<vmem>>, vector<1x32x128xf32>,
    return
  }
  func.func @transform_0(%arg0: i32, %arg1: i32) -> (i32, i32, i32) {
    %c0_i32 = arith.constant 0 : i32
    %c0_i32_0 = arith.constant 0 : i32
    return %arg0, %arg1, %c0_i32 : i32, i32, i32
  }
  func.func @transform_1(%arg0: i32, %arg1: i32) -> (i32, i32) {
    %c0_i32 = arith.constant 0 : i32
    %c0_i32_0 = arith.constant 0 : i32
    %c0_i32_1 = arith.constant 0 : i32
    return %c0_i32, %c0_i32_0 : i32, i32
  }
  func.func @transform_2(%arg0: i32, %arg1: i32) -> (i32, i32, i32) {
    %c0_i32 = arith.constant 0 : i32
    %c0_i32_0 = arith.constant 0 : i32
    %c0_i32_1 = arith.constant 0 : i32
    %c0_i32_2 = arith.constant 0 : i32
    return %c0_i32, %c0_i32_0, %c0_i32_1 : i32, i32, i32
  }
  func.func @transform_3(%arg0: i32, %arg1: i32) -> (i32, i32) {
    %c0_i32 = arith.constant 0 : i32
    %c0_i32_0 = arith.constant 0 : i32
    %c0_i32_1 = arith.constant 0 : i32
    return %c0_i32, %c0_i32_0 : i32, i32
  }
  func.func @transform_4(%arg0: i32, %arg1: i32) -> (i32, i32, i32) {
    %c0_i32 = arith.constant 0 : i32
    %c0_i32_0 = arith.constant 0 : i32
    return %arg0, %arg1, %c0_i32 : i32, i32, i32
  }
}

module attributes {stable_mosaic.version = 11 : i64} {
  func.func @kernel(%arg0: i32, %arg1: i32, %arg2: memref<1x32x128xf32, #tpu.memory_space<vmem>>, %arg3: memref<2x128xf32, #tpu.memory_space<vmem>>, %arg4: memref<2x128x128xbf16, #tpu.memory_space<vmem>>, %arg5: memref<1x128xf32, #tpu.memory_space<vmem>>, %arg6: memref<1x32x128xf32, #tpu.memory_space<vmem>>, %arg7: memref<1x2x128xf32, #tpu.memory_space<vmem>>, %arg8: memref<1x128xf32, #tpu.memory_space<vmem>>) attributes {dimension_semantics = [#tpu.dimension_semantics<parallel>, #tpu.dimension_semantics<arbitrary>], iteration_bounds = array<i64: 2, 4>, scalar_prefetch = 0 : i64, scratch_operands = 1 : i64, tpu.core_type = #tpu.core_type<tc>, window_params = [{transform_indices = @transform_0, window_bounds = array<i64: 1, 32, 128>}, {pipeline_mode = #tpu.pipeline_mode<synchronous>, transform_indices = @transform_1, window_bounds = array<i64: 2, 128>}, {pipeline_mode = #tpu.pipeline_mode<synchronous>, transform_indices = @transform_2, window_bounds = array<i64: 2, 128, 128>}, {pipeline_mode = #tpu.pipeline_mode<synchronous>, transform_indices = @transform_3, window_bounds = array<i64: 1, 128>}, {transform_indices = @transform_4, window_bounds = array<i64: 1, 32, 128>}, {transform_indices = @transform_5, window_bounds = array<i64: 1, 2, 128>}]} {
    %c0_i32 = arith.constant 0 : i32
    %0 = arith.cmpi eq, %arg1, %c0_i32 : i32
    %1 = arith.extui %0 : i1 to i32
    %c0_i32_0 = arith.constant 0 : i32
    %2 = arith.cmpi ne, %1, %c0_i32_0 : i32
    scf.if %2 {
      %cst_34 = arith.constant 0.000000e+00 : f32
      %55 = vector.broadcast %cst_34 : f32 to vector<1x128xf32>
      %c0_35 = arith.constant 0 : index
      %c0_36 = arith.constant 0 : index
      %56 = vector.load %arg8[%c0_35, %c0_36] : memref<1x128xf32, #tpu.memory_space<vmem>>, vector<1x128xf32>
      tpu.vector_store %arg8[%c0_35, %c0_36], %55 {strides = array<i32>} : memref<1x128xf32, #tpu.memory_space<vmem>>, vector<1x128xf32>,
    } else {
    }
    %c0 = arith.constant 0 : index
    %c0_1 = arith.constant 0 : index
    %c0_2 = arith.constant 0 : index
    %3 = vector.load %arg2[%c0, %c0_1, %c0_2] : memref<1x32x128xf32, #tpu.memory_space<vmem>>, vector<1x32x128xf32>
    %4 = vector.shape_cast %3 : vector<1x32x128xf32> to vector<32x128xf32>
    %c0_3 = arith.constant 0 : index
    %c0_4 = arith.constant 0 : index
    %5 = vector.load %arg3[%c0_3, %c0_4] : memref<2x128xf32, #tpu.memory_space<vmem>>, vector<1x128xf32>
    %c1 = arith.constant 1 : index
    %c0_5 = arith.constant 0 : index
    %6 = vector.load %arg3[%c1, %c0_5] : memref<2x128xf32, #tpu.memory_space<vmem>>, vector<1x128xf32>
    %7 = vector.broadcast %5 : vector<1x128xf32> to vector<32x128xf32>
    %8 = arith.mulf %4, %7 : vector<32x128xf32>
    %9 = vector.broadcast %6 : vector<1x128xf32> to vector<32x128xf32>
    %10 = arith.addf %8, %9 : vector<32x128xf32>
    %cst = arith.constant 0.000000e+00 : f32
    %11 = vector.broadcast %cst : f32 to vector<32x128xf32>
    %12 = tpu.iota {dimensions = array<i32: 0>} : vector<32x1xi32>
    %c1_i32 = arith.constant 1 : i32
    %13 = tpu.dynamic_rotate %10 by %c1_i32 dim 0 : vector<32x128xf32>, i32 -> vector<32x128xf32>
    %c0_6 = arith.constant 0 : index
    %c0_7 = arith.constant 0 : index
    %14 = vector.load %arg8[%c0_6, %c0_7] : memref<1x128xf32, #tpu.memory_space<vmem>>, vector<1x128xf32>
    %c0_i32_8 = arith.constant 0 : i32
    %15 = vector.broadcast %c0_i32_8 : i32 to vector<32x1xi32>
    %16 = arith.cmpi eq, %12, %15 : vector<32x1xi32>
    %17 = vector.shape_cast %14 : vector<1x128xf32> to vector<1x128xf32>
    %18 = vector.broadcast %17 : vector<1x128xf32> to vector<32x128xf32>
    %19 = vector.shape_cast %16 : vector<32x1xi1> to vector<32x1xi1>
    %20 = vector.broadcast %19 : vector<32x1xi1> to vector<32x128xi1>
    %21 = arith.select %20, %18, %13 : vector<32x128xi1>, vector<32x128xf32>
    %22 = arith.truncf %21 : vector<32x128xf32> to vector<32x128xbf16>
    %c0_9 = arith.constant 0 : index
    %c0_10 = arith.constant 0 : index
    %c0_11 = arith.constant 0 : index
    %23 = vector.load %arg4[%c0_9, %c0_10, %c0_11] : memref<2x128x128xbf16, #tpu.memory_space<vmem>>, vector<1x128x128xbf16>
    %24 = vector.shape_cast %23 : vector<1x128x128xbf16> to vector<128x128xbf16>
    %cst_12 = arith.constant dense<0.000000e+00> : vector<32x128xf32>
    %25 = tpu.matmul %22, %24, %cst_12 {dimension_numbers = #tpu.dot_dimension_numbers<[1], [0], [0], [1], [0, 0, 1, 1], [], []>} : vector<32x128xbf16>, vector<128x128xbf16>, vector<32x128xf32> -> vector<32x128xf32>
    %26 = arith.addf %11, %25 : vector<32x128xf32>
    %27 = arith.truncf %10 : vector<32x128xf32> to vector<32x128xbf16>
    %c1_13 = arith.constant 1 : index
    %c0_14 = arith.constant 0 : index
    %c0_15 = arith.constant 0 : index
    %28 = vector.load %arg4[%c1_13, %c0_14, %c0_15] : memref<2x128x128xbf16, #tpu.memory_space<vmem>>, vector<1x128x128xbf16>
    %29 = vector.shape_cast %28 : vector<1x128x128xbf16> to vector<128x128xbf16>
    %cst_16 = arith.constant dense<0.000000e+00> : vector<32x128xf32>
    %30 = tpu.matmul %27, %29, %cst_16 {dimension_numbers = #tpu.dot_dimension_numbers<[1], [0], [0], [1], [0, 0, 1, 1], [], []>} : vector<32x128xbf16>, vector<128x128xbf16>, vector<32x128xf32> -> vector<32x128xf32>
    %31 = arith.addf %26, %30 : vector<32x128xf32>
    %c0_17 = arith.constant 0 : index
    %c0_18 = arith.constant 0 : index
    %32 = vector.load %arg5[%c0_17, %c0_18] : memref<1x128xf32, #tpu.memory_space<vmem>>, vector<1x128xf32>
    %33 = vector.broadcast %32 : vector<1x128xf32> to vector<32x128xf32>
    %34 = arith.addf %31, %33 : vector<32x128xf32>
    %c0_19 = arith.constant 0 : index
    %c0_20 = arith.constant 0 : index
    %c0_21 = arith.constant 0 : index
    %35 = vector.load %arg6[%c0_19, %c0_20, %c0_21] : memref<1x32x128xf32, #tpu.memory_space<vmem>>, vector<1x32x128xf32>
    %36 = vector.shape_cast %35 : vector<1x32x128xf32> to vector<32x128xf32>
    %37 = vector.shape_cast %34 : vector<32x128xf32> to vector<1x32x128xf32>
    tpu.vector_store %arg6[%c0_19, %c0_20, %c0_21], %37 {strides = array<i32>} : memref<1x32x128xf32, #tpu.memory_space<vmem>>, vector<1x32x128xf32>,
    %c0_i32_22 = arith.constant 0 : i32
    %38 = arith.cmpi eq, %arg1, %c0_i32_22 : i32
    %39 = arith.extui %38 : i1 to i32
    %c0_i32_23 = arith.constant 0 : i32
    %40 = arith.cmpi ne, %39, %c0_i32_23 : i32
    scf.if %40 {
      %cst_34 = arith.constant 0.000000e+00 : f32
      %55 = vector.broadcast %cst_34 : f32 to vector<1x2x128xf32>
      %c0_35 = arith.constant 0 : index
      %c0_36 = arith.constant 0 : index
      %c0_37 = arith.constant 0 : index
      %56 = vector.load %arg7[%c0_35, %c0_36, %c0_37] : memref<1x2x128xf32, #tpu.memory_space<vmem>>, vector<1x2x128xf32>
      tpu.vector_store %arg7[%c0_35, %c0_36, %c0_37], %55 {strides = array<i32>} : memref<1x2x128xf32, #tpu.memory_space<vmem>>, vector<1x2x128xf32>,
    } else {
    }
    %cst_24 = arith.constant dense<0.000000e+00> : vector<128xf32>
    %41 = vector.multi_reduction <add>, %34, %cst_24 [0] : vector<32x128xf32> to vector<128xf32>
    %42 = vector.shape_cast %41 : vector<128xf32> to vector<1x128xf32>
    %43 = arith.mulf %34, %34 : vector<32x128xf32>
    %cst_25 = arith.constant dense<0.000000e+00> : vector<128xf32>
    %44 = vector.multi_reduction <add>, %43, %cst_25 [0] : vector<32x128xf32> to vector<128xf32>
    %45 = vector.shape_cast %44 : vector<128xf32> to vector<1x128xf32>
    %c0_26 = arith.constant 0 : index
    %c0_27 = arith.constant 0 : index
    %c0_28 = arith.constant 0 : index
    %46 = vector.load %arg7[%c0_26, %c0_27, %c0_28] : memref<1x2x128xf32, #tpu.memory_space<vmem>>, vector<1x2x128xf32>
    %47 = vector.shape_cast %46 : vector<1x2x128xf32> to vector<2x128xf32>
    %48 = tpu.concatenate %42, %45 in 0 : vector<1x128xf32>, vector<1x128xf32> -> vector<2x128xf32>
    %49 = arith.addf %47, %48 : vector<2x128xf32>
    %c0_29 = arith.constant 0 : index
    %c0_30 = arith.constant 0 : index
    %c0_31 = arith.constant 0 : index
    %50 = vector.load %arg7[%c0_29, %c0_30, %c0_31] : memref<1x2x128xf32, #tpu.memory_space<vmem>>, vector<1x2x128xf32>
    %51 = vector.shape_cast %50 : vector<1x2x128xf32> to vector<2x128xf32>
    %52 = vector.shape_cast %49 : vector<2x128xf32> to vector<1x2x128xf32>
    tpu.vector_store %arg7[%c0_29, %c0_30, %c0_31], %52 {strides = array<i32>} : memref<1x2x128xf32, #tpu.memory_space<vmem>>, vector<1x2x128xf32>,
    %53 = vector.extract_strided_slice %10 {offsets = [31, 0], sizes = [1, 128], strides = [1, 1]} : vector<32x128xf32> to vector<1x128xf32>
    %c0_32 = arith.constant 0 : index
    %c0_33 = arith.constant 0 : index
    %54 = vector.load %arg8[%c0_32, %c0_33] : memref<1x128xf32, #tpu.memory_space<vmem>>, vector<1x128xf32>
    tpu.vector_store %arg8[%c0_32, %c0_33], %53 {strides = array<i32>} : memref<1x128xf32, #tpu.memory_space<vmem>>, vector<1x128xf32>,
    return
  }
  func.func @transform_0(%arg0: i32, %arg1: i32) -> (i32, i32, i32) {
    %c0_i32 = arith.constant 0 : i32
    %c0_i32_0 = arith.constant 0 : i32
    return %arg0, %arg1, %c0_i32 : i32, i32, i32
  }
  func.func @transform_1(%arg0: i32, %arg1: i32) -> (i32, i32) {
    %c0_i32 = arith.constant 0 : i32
    %c0_i32_0 = arith.constant 0 : i32
    %c0_i32_1 = arith.constant 0 : i32
    return %c0_i32, %c0_i32_0 : i32, i32
  }
  func.func @transform_2(%arg0: i32, %arg1: i32) -> (i32, i32, i32) {
    %c0_i32 = arith.constant 0 : i32
    %c0_i32_0 = arith.constant 0 : i32
    %c0_i32_1 = arith.constant 0 : i32
    %c0_i32_2 = arith.constant 0 : i32
    return %c0_i32, %c0_i32_0, %c0_i32_1 : i32, i32, i32
  }
  func.func @transform_3(%arg0: i32, %arg1: i32) -> (i32, i32) {
    %c0_i32 = arith.constant 0 : i32
    %c0_i32_0 = arith.constant 0 : i32
    %c0_i32_1 = arith.constant 0 : i32
    return %c0_i32, %c0_i32_0 : i32, i32
  }
  func.func @transform_4(%arg0: i32, %arg1: i32) -> (i32, i32, i32) {
    %c0_i32 = arith.constant 0 : i32
    %c0_i32_0 = arith.constant 0 : i32
    return %arg0, %arg1, %c0_i32 : i32, i32, i32
  }
  func.func @transform_5(%arg0: i32, %arg1: i32) -> (i32, i32, i32) {
    %c0_i32 = arith.constant 0 : i32
    %c0_i32_0 = arith.constant 0 : i32
    %c0_i32_1 = arith.constant 0 : i32
    return %arg0, %c0_i32, %c0_i32_0 : i32, i32, i32
  }
}

module attributes {stable_mosaic.version = 11 : i64} {
  func.func @kernel(%arg0: i32, %arg1: i32, %arg2: memref<1x32x128xf32, #tpu.memory_space<vmem>>, %arg3: memref<2x128xf32, #tpu.memory_space<vmem>>, %arg4: memref<2x128x128xbf16, #tpu.memory_space<vmem>>, %arg5: memref<1x128xf32, #tpu.memory_space<vmem>>, %arg6: memref<1x32x128xf32, #tpu.memory_space<vmem>>, %arg7: memref<1x32x128xf32, #tpu.memory_space<vmem>>, %arg8: memref<1x2x128xf32, #tpu.memory_space<vmem>>, %arg9: memref<1x128xf32, #tpu.memory_space<vmem>>) attributes {dimension_semantics = [#tpu.dimension_semantics<parallel>, #tpu.dimension_semantics<arbitrary>], iteration_bounds = array<i64: 2, 4>, scalar_prefetch = 0 : i64, scratch_operands = 1 : i64, tpu.core_type = #tpu.core_type<tc>, window_params = [{transform_indices = @transform_0, window_bounds = array<i64: 1, 32, 128>}, {pipeline_mode = #tpu.pipeline_mode<synchronous>, transform_indices = @transform_1, window_bounds = array<i64: 2, 128>}, {pipeline_mode = #tpu.pipeline_mode<synchronous>, transform_indices = @transform_2, window_bounds = array<i64: 2, 128, 128>}, {pipeline_mode = #tpu.pipeline_mode<synchronous>, transform_indices = @transform_3, window_bounds = array<i64: 1, 128>}, {transform_indices = @transform_4, window_bounds = array<i64: 1, 32, 128>}, {transform_indices = @transform_5, window_bounds = array<i64: 1, 32, 128>}, {transform_indices = @transform_6, window_bounds = array<i64: 1, 2, 128>}]} {
    %c0_i32 = arith.constant 0 : i32
    %0 = arith.cmpi eq, %arg1, %c0_i32 : i32
    %1 = arith.extui %0 : i1 to i32
    %c0_i32_0 = arith.constant 0 : i32
    %2 = arith.cmpi ne, %1, %c0_i32_0 : i32
    scf.if %2 {
      %cst_38 = arith.constant 0.000000e+00 : f32
      %60 = vector.broadcast %cst_38 : f32 to vector<1x128xf32>
      %c0_39 = arith.constant 0 : index
      %c0_40 = arith.constant 0 : index
      %61 = vector.load %arg9[%c0_39, %c0_40] : memref<1x128xf32, #tpu.memory_space<vmem>>, vector<1x128xf32>
      tpu.vector_store %arg9[%c0_39, %c0_40], %60 {strides = array<i32>} : memref<1x128xf32, #tpu.memory_space<vmem>>, vector<1x128xf32>,
    } else {
    }
    %c0 = arith.constant 0 : index
    %c0_1 = arith.constant 0 : index
    %c0_2 = arith.constant 0 : index
    %3 = vector.load %arg2[%c0, %c0_1, %c0_2] : memref<1x32x128xf32, #tpu.memory_space<vmem>>, vector<1x32x128xf32>
    %4 = vector.shape_cast %3 : vector<1x32x128xf32> to vector<32x128xf32>
    %c0_3 = arith.constant 0 : index
    %c0_4 = arith.constant 0 : index
    %5 = vector.load %arg3[%c0_3, %c0_4] : memref<2x128xf32, #tpu.memory_space<vmem>>, vector<1x128xf32>
    %c1 = arith.constant 1 : index
    %c0_5 = arith.constant 0 : index
    %6 = vector.load %arg3[%c1, %c0_5] : memref<2x128xf32, #tpu.memory_space<vmem>>, vector<1x128xf32>
    %7 = vector.broadcast %5 : vector<1x128xf32> to vector<32x128xf32>
    %8 = arith.mulf %4, %7 : vector<32x128xf32>
    %9 = vector.broadcast %6 : vector<1x128xf32> to vector<32x128xf32>
    %10 = arith.addf %8, %9 : vector<32x128xf32>
    %cst = arith.constant 0.000000e+00 : f32
    %11 = vector.broadcast %cst : f32 to vector<32x128xf32>
    %12 = arith.maximumf %10, %11 : vector<32x128xf32>
    %cst_6 = arith.constant 0.000000e+00 : f32
    %13 = vector.broadcast %cst_6 : f32 to vector<32x128xf32>
    %14 = tpu.iota {dimensions = array<i32: 0>} : vector<32x1xi32>
    %c1_i32 = arith.constant 1 : i32
    %15 = tpu.dynamic_rotate %12 by %c1_i32 dim 0 : vector<32x128xf32>, i32 -> vector<32x128xf32>
    %c0_7 = arith.constant 0 : index
    %c0_8 = arith.constant 0 : index
    %16 = vector.load %arg9[%c0_7, %c0_8] : memref<1x128xf32, #tpu.memory_space<vmem>>, vector<1x128xf32>
    %c0_i32_9 = arith.constant 0 : i32
    %17 = vector.broadcast %c0_i32_9 : i32 to vector<32x1xi32>
    %18 = arith.cmpi eq, %14, %17 : vector<32x1xi32>
    %19 = vector.shape_cast %16 : vector<1x128xf32> to vector<1x128xf32>
    %20 = vector.broadcast %19 : vector<1x128xf32> to vector<32x128xf32>
    %21 = vector.shape_cast %18 : vector<32x1xi1> to vector<32x1xi1>
    %22 = vector.broadcast %21 : vector<32x1xi1> to vector<32x128xi1>
    %23 = arith.select %22, %20, %15 : vector<32x128xi1>, vector<32x128xf32>
    %24 = arith.truncf %23 : vector<32x128xf32> to vector<32x128xbf16>
    %c0_10 = arith.constant 0 : index
    %c0_11 = arith.constant 0 : index
    %c0_12 = arith.constant 0 : index
    %25 = vector.load %arg4[%c0_10, %c0_11, %c0_12] : memref<2x128x128xbf16, #tpu.memory_space<vmem>>, vector<1x128x128xbf16>
    %26 = vector.shape_cast %25 : vector<1x128x128xbf16> to vector<128x128xbf16>
    %cst_13 = arith.constant dense<0.000000e+00> : vector<32x128xf32>
    %27 = tpu.matmul %24, %26, %cst_13 {dimension_numbers = #tpu.dot_dimension_numbers<[1], [0], [0], [1], [0, 0, 1, 1], [], []>} : vector<32x128xbf16>, vector<128x128xbf16>, vector<32x128xf32> -> vector<32x128xf32>
    %28 = arith.addf %13, %27 : vector<32x128xf32>
    %29 = arith.truncf %12 : vector<32x128xf32> to vector<32x128xbf16>
    %c1_14 = arith.constant 1 : index
    %c0_15 = arith.constant 0 : index
    %c0_16 = arith.constant 0 : index
    %30 = vector.load %arg4[%c1_14, %c0_15, %c0_16] : memref<2x128x128xbf16, #tpu.memory_space<vmem>>, vector<1x128x128xbf16>
    %31 = vector.shape_cast %30 : vector<1x128x128xbf16> to vector<128x128xbf16>
    %cst_17 = arith.constant dense<0.000000e+00> : vector<32x128xf32>
    %32 = tpu.matmul %29, %31, %cst_17 {dimension_numbers = #tpu.dot_dimension_numbers<[1], [0], [0], [1], [0, 0, 1, 1], [], []>} : vector<32x128xbf16>, vector<128x128xbf16>, vector<32x128xf32> -> vector<32x128xf32>
    %33 = arith.addf %28, %32 : vector<32x128xf32>
    %c0_18 = arith.constant 0 : index
    %c0_19 = arith.constant 0 : index
    %34 = vector.load %arg5[%c0_18, %c0_19] : memref<1x128xf32, #tpu.memory_space<vmem>>, vector<1x128xf32>
    %35 = vector.broadcast %34 : vector<1x128xf32> to vector<32x128xf32>
    %36 = arith.addf %33, %35 : vector<32x128xf32>
    %c0_20 = arith.constant 0 : index
    %c0_21 = arith.constant 0 : index
    %c0_22 = arith.constant 0 : index
    %37 = vector.load %arg6[%c0_20, %c0_21, %c0_22] : memref<1x32x128xf32, #tpu.memory_space<vmem>>, vector<1x32x128xf32>
    %38 = vector.shape_cast %37 : vector<1x32x128xf32> to vector<32x128xf32>
    %39 = arith.addf %36, %38 : vector<32x128xf32>
    %c0_23 = arith.constant 0 : index
    %c0_24 = arith.constant 0 : index
    %c0_25 = arith.constant 0 : index
    %40 = vector.load %arg7[%c0_23, %c0_24, %c0_25] : memref<1x32x128xf32, #tpu.memory_space<vmem>>, vector<1x32x128xf32>
    %41 = vector.shape_cast %40 : vector<1x32x128xf32> to vector<32x128xf32>
    %42 = vector.shape_cast %39 : vector<32x128xf32> to vector<1x32x128xf32>
    tpu.vector_store %arg7[%c0_23, %c0_24, %c0_25], %42 {strides = array<i32>} : memref<1x32x128xf32, #tpu.memory_space<vmem>>, vector<1x32x128xf32>,
    %c0_i32_26 = arith.constant 0 : i32
    %43 = arith.cmpi eq, %arg1, %c0_i32_26 : i32
    %44 = arith.extui %43 : i1 to i32
    %c0_i32_27 = arith.constant 0 : i32
    %45 = arith.cmpi ne, %44, %c0_i32_27 : i32
    scf.if %45 {
      %cst_38 = arith.constant 0.000000e+00 : f32
      %60 = vector.broadcast %cst_38 : f32 to vector<1x2x128xf32>
      %c0_39 = arith.constant 0 : index
      %c0_40 = arith.constant 0 : index
      %c0_41 = arith.constant 0 : index
      %61 = vector.load %arg8[%c0_39, %c0_40, %c0_41] : memref<1x2x128xf32, #tpu.memory_space<vmem>>, vector<1x2x128xf32>
      tpu.vector_store %arg8[%c0_39, %c0_40, %c0_41], %60 {strides = array<i32>} : memref<1x2x128xf32, #tpu.memory_space<vmem>>, vector<1x2x128xf32>,
    } else {
    }
    %cst_28 = arith.constant dense<0.000000e+00> : vector<128xf32>
    %46 = vector.multi_reduction <add>, %39, %cst_28 [0] : vector<32x128xf32> to vector<128xf32>
    %47 = vector.shape_cast %46 : vector<128xf32> to vector<1x128xf32>
    %48 = arith.mulf %39, %39 : vector<32x128xf32>
    %cst_29 = arith.constant dense<0.000000e+00> : vector<128xf32>
    %49 = vector.multi_reduction <add>, %48, %cst_29 [0] : vector<32x128xf32> to vector<128xf32>
    %50 = vector.shape_cast %49 : vector<128xf32> to vector<1x128xf32>
    %c0_30 = arith.constant 0 : index
    %c0_31 = arith.constant 0 : index
    %c0_32 = arith.constant 0 : index
    %51 = vector.load %arg8[%c0_30, %c0_31, %c0_32] : memref<1x2x128xf32, #tpu.memory_space<vmem>>, vector<1x2x128xf32>
    %52 = vector.shape_cast %51 : vector<1x2x128xf32> to vector<2x128xf32>
    %53 = tpu.concatenate %47, %50 in 0 : vector<1x128xf32>, vector<1x128xf32> -> vector<2x128xf32>
    %54 = arith.addf %52, %53 : vector<2x128xf32>
    %c0_33 = arith.constant 0 : index
    %c0_34 = arith.constant 0 : index
    %c0_35 = arith.constant 0 : index
    %55 = vector.load %arg8[%c0_33, %c0_34, %c0_35] : memref<1x2x128xf32, #tpu.memory_space<vmem>>, vector<1x2x128xf32>
    %56 = vector.shape_cast %55 : vector<1x2x128xf32> to vector<2x128xf32>
    %57 = vector.shape_cast %54 : vector<2x128xf32> to vector<1x2x128xf32>
    tpu.vector_store %arg8[%c0_33, %c0_34, %c0_35], %57 {strides = array<i32>} : memref<1x2x128xf32, #tpu.memory_space<vmem>>, vector<1x2x128xf32>,
    %58 = vector.extract_strided_slice %12 {offsets = [31, 0], sizes = [1, 128], strides = [1, 1]} : vector<32x128xf32> to vector<1x128xf32>
    %c0_36 = arith.constant 0 : index
    %c0_37 = arith.constant 0 : index
    %59 = vector.load %arg9[%c0_36, %c0_37] : memref<1x128xf32, #tpu.memory_space<vmem>>, vector<1x128xf32>
    tpu.vector_store %arg9[%c0_36, %c0_37], %58 {strides = array<i32>} : memref<1x128xf32, #tpu.memory_space<vmem>>, vector<1x128xf32>,
    return
  }
  func.func @transform_0(%arg0: i32, %arg1: i32) -> (i32, i32, i32) {
    %c0_i32 = arith.constant 0 : i32
    %c0_i32_0 = arith.constant 0 : i32
    return %arg0, %arg1, %c0_i32 : i32, i32, i32
  }
  func.func @transform_1(%arg0: i32, %arg1: i32) -> (i32, i32) {
    %c0_i32 = arith.constant 0 : i32
    %c0_i32_0 = arith.constant 0 : i32
    %c0_i32_1 = arith.constant 0 : i32
    return %c0_i32, %c0_i32_0 : i32, i32
  }
  func.func @transform_2(%arg0: i32, %arg1: i32) -> (i32, i32, i32) {
    %c0_i32 = arith.constant 0 : i32
    %c0_i32_0 = arith.constant 0 : i32
    %c0_i32_1 = arith.constant 0 : i32
    %c0_i32_2 = arith.constant 0 : i32
    return %c0_i32, %c0_i32_0, %c0_i32_1 : i32, i32, i32
  }
  func.func @transform_3(%arg0: i32, %arg1: i32) -> (i32, i32) {
    %c0_i32 = arith.constant 0 : i32
    %c0_i32_0 = arith.constant 0 : i32
    %c0_i32_1 = arith.constant 0 : i32
    return %c0_i32, %c0_i32_0 : i32, i32
  }
  func.func @transform_4(%arg0: i32, %arg1: i32) -> (i32, i32, i32) {
    %c0_i32 = arith.constant 0 : i32
    %c0_i32_0 = arith.constant 0 : i32
    return %arg0, %arg1, %c0_i32 : i32, i32, i32
  }
  func.func @transform_5(%arg0: i32, %arg1: i32) -> (i32, i32, i32) {
    %c0_i32 = arith.constant 0 : i32
    %c0_i32_0 = arith.constant 0 : i32
    return %arg0, %arg1, %c0_i32 : i32, i32, i32
  }
  func.func @transform_6(%arg0: i32, %arg1: i32) -> (i32, i32, i32) {
    %c0_i32 = arith.constant 0 : i32
    %c0_i32_0 = arith.constant 0 : i32
    %c0_i32_1 = arith.constant 0 : i32
    return %arg0, %c0_i32, %c0_i32_0 : i32, i32, i32
  }
}

module attributes {stable_mosaic.version = 11 : i64} {
  func.func @kernel(%arg0: i32, %arg1: i32, %arg2: memref<1x32x128xf32, #tpu.memory_space<vmem>>, %arg3: memref<2x128xf32, #tpu.memory_space<vmem>>, %arg4: memref<2x128x128xbf16, #tpu.memory_space<vmem>>, %arg5: memref<1x128xf32, #tpu.memory_space<vmem>>, %arg6: memref<1x32x128xf32, #tpu.memory_space<vmem>>, %arg7: memref<1x2x128xf32, #tpu.memory_space<vmem>>, %arg8: memref<1x128xf32, #tpu.memory_space<vmem>>) attributes {dimension_semantics = [#tpu.dimension_semantics<parallel>, #tpu.dimension_semantics<arbitrary>], iteration_bounds = array<i64: 2, 4>, scalar_prefetch = 0 : i64, scratch_operands = 1 : i64, tpu.core_type = #tpu.core_type<tc>, window_params = [{transform_indices = @transform_0, window_bounds = array<i64: 1, 32, 128>}, {pipeline_mode = #tpu.pipeline_mode<synchronous>, transform_indices = @transform_1, window_bounds = array<i64: 2, 128>}, {pipeline_mode = #tpu.pipeline_mode<synchronous>, transform_indices = @transform_2, window_bounds = array<i64: 2, 128, 128>}, {pipeline_mode = #tpu.pipeline_mode<synchronous>, transform_indices = @transform_3, window_bounds = array<i64: 1, 128>}, {transform_indices = @transform_4, window_bounds = array<i64: 1, 32, 128>}, {transform_indices = @transform_5, window_bounds = array<i64: 1, 2, 128>}]} {
    %c0_i32 = arith.constant 0 : i32
    %0 = arith.cmpi eq, %arg1, %c0_i32 : i32
    %1 = arith.extui %0 : i1 to i32
    %c0_i32_0 = arith.constant 0 : i32
    %2 = arith.cmpi ne, %1, %c0_i32_0 : i32
    scf.if %2 {
      %cst_35 = arith.constant 0.000000e+00 : f32
      %57 = vector.broadcast %cst_35 : f32 to vector<1x128xf32>
      %c0_36 = arith.constant 0 : index
      %c0_37 = arith.constant 0 : index
      %58 = vector.load %arg8[%c0_36, %c0_37] : memref<1x128xf32, #tpu.memory_space<vmem>>, vector<1x128xf32>
      tpu.vector_store %arg8[%c0_36, %c0_37], %57 {strides = array<i32>} : memref<1x128xf32, #tpu.memory_space<vmem>>, vector<1x128xf32>,
    } else {
    }
    %c0 = arith.constant 0 : index
    %c0_1 = arith.constant 0 : index
    %c0_2 = arith.constant 0 : index
    %3 = vector.load %arg2[%c0, %c0_1, %c0_2] : memref<1x32x128xf32, #tpu.memory_space<vmem>>, vector<1x32x128xf32>
    %4 = vector.shape_cast %3 : vector<1x32x128xf32> to vector<32x128xf32>
    %c0_3 = arith.constant 0 : index
    %c0_4 = arith.constant 0 : index
    %5 = vector.load %arg3[%c0_3, %c0_4] : memref<2x128xf32, #tpu.memory_space<vmem>>, vector<1x128xf32>
    %c1 = arith.constant 1 : index
    %c0_5 = arith.constant 0 : index
    %6 = vector.load %arg3[%c1, %c0_5] : memref<2x128xf32, #tpu.memory_space<vmem>>, vector<1x128xf32>
    %7 = vector.broadcast %5 : vector<1x128xf32> to vector<32x128xf32>
    %8 = arith.mulf %4, %7 : vector<32x128xf32>
    %9 = vector.broadcast %6 : vector<1x128xf32> to vector<32x128xf32>
    %10 = arith.addf %8, %9 : vector<32x128xf32>
    %cst = arith.constant 0.000000e+00 : f32
    %11 = vector.broadcast %cst : f32 to vector<32x128xf32>
    %12 = arith.maximumf %10, %11 : vector<32x128xf32>
    %cst_6 = arith.constant 0.000000e+00 : f32
    %13 = vector.broadcast %cst_6 : f32 to vector<32x128xf32>
    %14 = tpu.iota {dimensions = array<i32: 0>} : vector<32x1xi32>
    %c1_i32 = arith.constant 1 : i32
    %15 = tpu.dynamic_rotate %12 by %c1_i32 dim 0 : vector<32x128xf32>, i32 -> vector<32x128xf32>
    %c0_7 = arith.constant 0 : index
    %c0_8 = arith.constant 0 : index
    %16 = vector.load %arg8[%c0_7, %c0_8] : memref<1x128xf32, #tpu.memory_space<vmem>>, vector<1x128xf32>
    %c0_i32_9 = arith.constant 0 : i32
    %17 = vector.broadcast %c0_i32_9 : i32 to vector<32x1xi32>
    %18 = arith.cmpi eq, %14, %17 : vector<32x1xi32>
    %19 = vector.shape_cast %16 : vector<1x128xf32> to vector<1x128xf32>
    %20 = vector.broadcast %19 : vector<1x128xf32> to vector<32x128xf32>
    %21 = vector.shape_cast %18 : vector<32x1xi1> to vector<32x1xi1>
    %22 = vector.broadcast %21 : vector<32x1xi1> to vector<32x128xi1>
    %23 = arith.select %22, %20, %15 : vector<32x128xi1>, vector<32x128xf32>
    %24 = arith.truncf %23 : vector<32x128xf32> to vector<32x128xbf16>
    %c0_10 = arith.constant 0 : index
    %c0_11 = arith.constant 0 : index
    %c0_12 = arith.constant 0 : index
    %25 = vector.load %arg4[%c0_10, %c0_11, %c0_12] : memref<2x128x128xbf16, #tpu.memory_space<vmem>>, vector<1x128x128xbf16>
    %26 = vector.shape_cast %25 : vector<1x128x128xbf16> to vector<128x128xbf16>
    %cst_13 = arith.constant dense<0.000000e+00> : vector<32x128xf32>
    %27 = tpu.matmul %24, %26, %cst_13 {dimension_numbers = #tpu.dot_dimension_numbers<[1], [0], [0], [1], [0, 0, 1, 1], [], []>} : vector<32x128xbf16>, vector<128x128xbf16>, vector<32x128xf32> -> vector<32x128xf32>
    %28 = arith.addf %13, %27 : vector<32x128xf32>
    %29 = arith.truncf %12 : vector<32x128xf32> to vector<32x128xbf16>
    %c1_14 = arith.constant 1 : index
    %c0_15 = arith.constant 0 : index
    %c0_16 = arith.constant 0 : index
    %30 = vector.load %arg4[%c1_14, %c0_15, %c0_16] : memref<2x128x128xbf16, #tpu.memory_space<vmem>>, vector<1x128x128xbf16>
    %31 = vector.shape_cast %30 : vector<1x128x128xbf16> to vector<128x128xbf16>
    %cst_17 = arith.constant dense<0.000000e+00> : vector<32x128xf32>
    %32 = tpu.matmul %29, %31, %cst_17 {dimension_numbers = #tpu.dot_dimension_numbers<[1], [0], [0], [1], [0, 0, 1, 1], [], []>} : vector<32x128xbf16>, vector<128x128xbf16>, vector<32x128xf32> -> vector<32x128xf32>
    %33 = arith.addf %28, %32 : vector<32x128xf32>
    %c0_18 = arith.constant 0 : index
    %c0_19 = arith.constant 0 : index
    %34 = vector.load %arg5[%c0_18, %c0_19] : memref<1x128xf32, #tpu.memory_space<vmem>>, vector<1x128xf32>
    %35 = vector.broadcast %34 : vector<1x128xf32> to vector<32x128xf32>
    %36 = arith.addf %33, %35 : vector<32x128xf32>
    %c0_20 = arith.constant 0 : index
    %c0_21 = arith.constant 0 : index
    %c0_22 = arith.constant 0 : index
    %37 = vector.load %arg6[%c0_20, %c0_21, %c0_22] : memref<1x32x128xf32, #tpu.memory_space<vmem>>, vector<1x32x128xf32>
    %38 = vector.shape_cast %37 : vector<1x32x128xf32> to vector<32x128xf32>
    %39 = vector.shape_cast %36 : vector<32x128xf32> to vector<1x32x128xf32>
    tpu.vector_store %arg6[%c0_20, %c0_21, %c0_22], %39 {strides = array<i32>} : memref<1x32x128xf32, #tpu.memory_space<vmem>>, vector<1x32x128xf32>,
    %c0_i32_23 = arith.constant 0 : i32
    %40 = arith.cmpi eq, %arg1, %c0_i32_23 : i32
    %41 = arith.extui %40 : i1 to i32
    %c0_i32_24 = arith.constant 0 : i32
    %42 = arith.cmpi ne, %41, %c0_i32_24 : i32
    scf.if %42 {
      %cst_35 = arith.constant 0.000000e+00 : f32
      %57 = vector.broadcast %cst_35 : f32 to vector<1x2x128xf32>
      %c0_36 = arith.constant 0 : index
      %c0_37 = arith.constant 0 : index
      %c0_38 = arith.constant 0 : index
      %58 = vector.load %arg7[%c0_36, %c0_37, %c0_38] : memref<1x2x128xf32, #tpu.memory_space<vmem>>, vector<1x2x128xf32>
      tpu.vector_store %arg7[%c0_36, %c0_37, %c0_38], %57 {strides = array<i32>} : memref<1x2x128xf32, #tpu.memory_space<vmem>>, vector<1x2x128xf32>,
    } else {
    }
    %cst_25 = arith.constant dense<0.000000e+00> : vector<128xf32>
    %43 = vector.multi_reduction <add>, %36, %cst_25 [0] : vector<32x128xf32> to vector<128xf32>
    %44 = vector.shape_cast %43 : vector<128xf32> to vector<1x128xf32>
    %45 = arith.mulf %36, %36 : vector<32x128xf32>
    %cst_26 = arith.constant dense<0.000000e+00> : vector<128xf32>
    %46 = vector.multi_reduction <add>, %45, %cst_26 [0] : vector<32x128xf32> to vector<128xf32>
    %47 = vector.shape_cast %46 : vector<128xf32> to vector<1x128xf32>
    %c0_27 = arith.constant 0 : index
    %c0_28 = arith.constant 0 : index
    %c0_29 = arith.constant 0 : index
    %48 = vector.load %arg7[%c0_27, %c0_28, %c0_29] : memref<1x2x128xf32, #tpu.memory_space<vmem>>, vector<1x2x128xf32>
    %49 = vector.shape_cast %48 : vector<1x2x128xf32> to vector<2x128xf32>
    %50 = tpu.concatenate %44, %47 in 0 : vector<1x128xf32>, vector<1x128xf32> -> vector<2x128xf32>
    %51 = arith.addf %49, %50 : vector<2x128xf32>
    %c0_30 = arith.constant 0 : index
    %c0_31 = arith.constant 0 : index
    %c0_32 = arith.constant 0 : index
    %52 = vector.load %arg7[%c0_30, %c0_31, %c0_32] : memref<1x2x128xf32, #tpu.memory_space<vmem>>, vector<1x2x128xf32>
    %53 = vector.shape_cast %52 : vector<1x2x128xf32> to vector<2x128xf32>
    %54 = vector.shape_cast %51 : vector<2x128xf32> to vector<1x2x128xf32>
    tpu.vector_store %arg7[%c0_30, %c0_31, %c0_32], %54 {strides = array<i32>} : memref<1x2x128xf32, #tpu.memory_space<vmem>>, vector<1x2x128xf32>,
    %55 = vector.extract_strided_slice %12 {offsets = [31, 0], sizes = [1, 128], strides = [1, 1]} : vector<32x128xf32> to vector<1x128xf32>
    %c0_33 = arith.constant 0 : index
    %c0_34 = arith.constant 0 : index
    %56 = vector.load %arg8[%c0_33, %c0_34] : memref<1x128xf32, #tpu.memory_space<vmem>>, vector<1x128xf32>
    tpu.vector_store %arg8[%c0_33, %c0_34], %55 {strides = array<i32>} : memref<1x128xf32, #tpu.memory_space<vmem>>, vector<1x128xf32>,
    return
  }
  func.func @transform_0(%arg0: i32, %arg1: i32) -> (i32, i32, i32) {
    %c0_i32 = arith.constant 0 : i32
    %c0_i32_0 = arith.constant 0 : i32
    return %arg0, %arg1, %c0_i32 : i32, i32, i32
  }
  func.func @transform_1(%arg0: i32, %arg1: i32) -> (i32, i32) {
    %c0_i32 = arith.constant 0 : i32
    %c0_i32_0 = arith.constant 0 : i32
    %c0_i32_1 = arith.constant 0 : i32
    return %c0_i32, %c0_i32_0 : i32, i32
  }
  func.func @transform_2(%arg0: i32, %arg1: i32) -> (i32, i32, i32) {
    %c0_i32 = arith.constant 0 : i32
    %c0_i32_0 = arith.constant 0 : i32
    %c0_i32_1 = arith.constant 0 : i32
    %c0_i32_2 = arith.constant 0 : i32
    return %c0_i32, %c0_i32_0, %c0_i32_1 : i32, i32, i32
  }
  func.func @transform_3(%arg0: i32, %arg1: i32) -> (i32, i32) {
    %c0_i32 = arith.constant 0 : i32
    %c0_i32_0 = arith.constant 0 : i32
    %c0_i32_1 = arith.constant 0 : i32
    return %c0_i32, %c0_i32_0 : i32, i32
  }
  func.func @transform_4(%arg0: i32, %arg1: i32) -> (i32, i32, i32) {
    %c0_i32 = arith.constant 0 : i32
    %c0_i32_0 = arith.constant 0 : i32
    return %arg0, %arg1, %c0_i32 : i32, i32, i32
  }
  func.func @transform_5(%arg0: i32, %arg1: i32) -> (i32, i32, i32) {
    %c0_i32 = arith.constant 0 : i32
    %c0_i32_0 = arith.constant 0 : i32
    %c0_i32_1 = arith.constant 0 : i32
    return %arg0, %c0_i32, %c0_i32_0 : i32, i32, i32
  }
}

</mosaic_0001>

<llo_original>
// kernel: conv_model_forward.19
$region0: #{conv_model_forward.19}
  #allocation0 [shape = 'u32[]', space=smem, size = 0x4, offset = 0x4, fixed_abs, tag = 'smem constant byte address 0x4 - core index']
  #allocation1 [shape = 'u32[72,128]{1,0:T(1,128)}', space=vmem, size = 0x9000, scoped, tag = 'internal scratch']
  %s0 = inlined_call_operand.vmem [shape: f32[2,128,128], index: 0, kind: input, shape index: {}]
  %s1 = inlined_call_operand.vmem [shape: f32[2,128], index: 1, kind: input, shape index: {}]
  %s2 = inlined_call_operand.vmem [shape: bf16[1,128,128], index: 2, kind: input, shape index: {}]
  %s3 = inlined_call_operand.vmem [shape: f32[1,128], index: 3, kind: input, shape index: {}]
  %s4 = inlined_call_operand.vmem [shape: f32[2,128,128], index: 4, kind: output, shape index: {}]
  %s5 = sld [smem:[#allocation0]]
  $region49: #{conv_model_forward.19} parent=0
    _
  %s7 = ssub.s32 1, %s5
  %s8 = scalar_select 0, %s7, %s5
  loop: start=0, step=1, limit=10
  $region2: #{conv_model_forward.19} parent=0 // loop_pre_header
    _
  $region3: #{conv_model_forward.19} parent=0 // loop_header
    %s10 = sphi 0, %s14
    %p11 = scmp.ge.s32.totalorder %s10, 10
    %s17 = sphi 0, %s29
    %s18 = sphi 0, %s25
    %s19 = sphi 0, %s17
    %s20 = sphi 0, %s18
    %s21 = sphi 0, %s19
    %s22 = sphi 0, %s20
    %s34 = sphi 0, %s36
    %s37 = sphi 0, %s34
    %s38 = sphi 0, %s37
    %s54 = sphi 0, %s38
    %s58 = sphi 0, %s58
    %s60 = sphi 0, %s58
    %s61 = sphi 0, %s60
    %s75 = sphi 0, %s61
    %s79 = sphi 0, %s79
    %s81 = sphi 0, %s79
    %s82 = sphi 0, %s81
    %s96 = sphi 0, %s82
    %s100 = sphi 0, %s100
    %s102 = sphi 0, %s100
    %s103 = sphi 0, %s102
    %s117 = sphi 0, %s103
    %s125 = sphi 0, %s127
    %s128 = sphi 0, %s125
    %s129 = sphi 0, %s128
    %s145 = sphi 0, %s129
  $region4: #{conv_model_forward.19} parent=0 // loop_header_branch
    %13 = sbr.rel (%p11) target = $region8
  $region5: #{conv_model_forward.19} parent=0 // loop_body
    %s15 = ssub.s32 %s10, 1
    %s16 = ssub.s32 %s10, 2
    %s23 = sadd.s32 1, %s18
    %p24 = scmp.ge.s32.totalorder %s23, 4
    %s25 = scalar_select %p24, 0, %s23
    %s26 = sadd.s32 1, %s17
    %s27 = scalar_select %p24, %s26, %s17
    %p28 = scmp.ge.s32.totalorder %s27, 2
    %s29 = scalar_select %p28, 0, %s27
    %s30 = ssub.s32 %s17, %s29
    %s31 = ssub.s32 %s18, %s25
    %s32 = sor.u32 %s30, %s31
    %p33 = scmp.eq.s32.totalorder %s32, 0
    %s35 = sadd.s32 %s34, 1
    %s36 = scalar_select %p33, %s34, %s35
    %p39 = pneg %p33
    %p40 = scmp.eq.s32.totalorder %s10, 7
    %p41 = por %p39, %p40
    %p42 = scmp.ne.s32.totalorder %s34, %s37
    %p43 = scmp.eq.s32.totalorder %s10, 0
    %p44 = por %p42, %p43
    %p45 = scmp.ne.s32.totalorder %s34, %s37
    %p46 = scmp.eq.s32.totalorder %s15, 7
    %p47 = por %p45, %p46
    %p48 = scmp.ne.s32.totalorder %s37, %s38
    %p49 = scmp.eq.s32.totalorder %s15, 0
    %p50 = por %p48, %p49
    %p51 = scmp.ne.s32.totalorder %s37, %s38
    %p52 = scmp.eq.s32.totalorder %s16, 7
    %p53 = por %p51, %p52
    %p55 = scmp.ne.s32.totalorder %s38, %s54
    %p56 = scmp.eq.s32.totalorder %s16, 0
    %p57 = por %p55, %p56
    %s59 = sadd.s32 %s58, 1
    %p62 = scmp.eq.s32.totalorder %s10, 7
    %p63 = scmp.ne.s32.totalorder %s58, %s60
    %p64 = scmp.eq.s32.totalorder %s10, 0
    %p65 = por %p63, %p64
    %p66 = scmp.ne.s32.totalorder %s58, %s60
    %p67 = scmp.eq.s32.totalorder %s15, 7
    %p68 = por %p66, %p67
    %p69 = scmp.ne.s32.totalorder %s60, %s61
    %p70 = scmp.eq.s32.totalorder %s15, 0
    %p71 = por %p69, %p70
    %p72 = scmp.ne.s32.totalorder %s60, %s61
    %p73 = scmp.eq.s32.totalorder %s16, 7
    %p74 = por %p72, %p73
    %p76 = scmp.ne.s32.totalorder %s61, %s75
    %p77 = scmp.eq.s32.totalorder %s16, 0
    %p78 = por %p76, %p77
    %s80 = sadd.s32 %s79, 1
    %p83 = scmp.eq.s32.totalorder %s10, 7
    %p84 = scmp.ne.s32.totalorder %s79, %s81
    %p85 = scmp.eq.s32.totalorder %s10, 0
    %p86 = por %p84, %p85
    %p87 = scmp.ne.s32.totalorder %s79, %s81
    %p88 = scmp.eq.s32.totalorder %s15, 7
    %p89 = por %p87, %p88
    %p90 = scmp.ne.s32.totalorder %s81, %s82
    %p91 = scmp.eq.s32.totalorder %s15, 0
    %p92 = por %p90, %p91
    %p93 = scmp.ne.s32.totalorder %s81, %s82
    %p94 = scmp.eq.s32.totalorder %s16, 7
    %p95 = por %p93, %p94
    %p97 = scmp.ne.s32.totalorder %s82, %s96
    %p98 = scmp.eq.s32.totalorder %s16, 0
    %p99 = por %p97, %p98
    %s101 = sadd.s32 %s100, 1
    %p104 = scmp.eq.s32.totalorder %s10, 7
    %p105 = scmp.ne.s32.totalorder %s100, %s102
    %p106 = scmp.eq.s32.totalorder %s10, 0
    %p107 = por %p105, %p106
    %p108 = scmp.ne.s32.totalorder %s100, %s102
    %p109 = scmp.eq.s32.totalorder %s15, 7
    %p110 = por %p108, %p109
    %p111 = scmp.ne.s32.totalorder %s102, %s103
    %p112 = scmp.eq.s32.totalorder %s15, 0
    %p113 = por %p111, %p112
    %p114 = scmp.ne.s32.totalorder %s102, %s103
    %p115 = scmp.eq.s32.totalorder %s16, 7
    %p116 = por %p114, %p115
    %p118 = scmp.ne.s32.totalorder %s103, %s117
    %p119 = scmp.eq.s32.totalorder %s16, 0
    %p120 = por %p118, %p119
    %s121 = ssub.s32 %s17, %s29
    %s122 = ssub.s32 %s18, %s25
    %s123 = sor.u32 %s121, %s122
    %p124 = scmp.eq.s32.totalorder %s123, 0
    %s126 = sadd.s32 %s125, 1
    %s127 = scalar_select %p124, %s125, %s126
    %p130 = pneg %p124
    %p131 = scmp.eq.s32.totalorder %s10, 7
    %p132 = por %p130, %p131
    %p133 = scmp.ne.s32.totalorder %s125, %s128
    %p134 = scmp.eq.s32.totalorder %s10, 0
    %p135 = por %p133, %p134
    %p136 = scmp.ne.s32.totalorder %s125, %s128
    %p137 = scmp.eq.s32.totalorder %s15, 7
    %p138 = por %p136, %p137
    %p139 = scmp.ne.s32.totalorder %s128, %s129
    %p140 = scmp.eq.s32.totalorder %s15, 0
    %p141 = por %p139, %p140
    %p142 = scmp.ne.s32.totalorder %s128, %s129
    %p143 = scmp.eq.s32.totalorder %s16, 7
    %p144 = por %p142, %p143
    %p146 = scmp.ne.s32.totalorder %s129, %s145
    %p147 = scmp.eq.s32.totalorder %s16, 0
    %p148 = por %p146, %p147
    %p149 = scmp.le.s32.totalorder 1, %s10
    %p150 = scmp.lt.s32.totalorder %s10, 9
    %p151 = pnand %p149, %p150
    %p152 = pneg %p151
    // Predicated region
    $region9: #{conv_model_forward.19} parent=5 // pred_check
      _
    $region10: #{conv_model_forward.19} parent=5 // pred_check_branch
      %154 = sbr.rel (%p151) target = $region12
    $region11: #{conv_model_forward.19} parent=5 // pred_region
      %s155 = ssub.s32 %s10, 1
      // Predicated region
      $region13: #{conv_model_forward.19} parent=11 // pred_check
        %p156 = pneg %p71
      $region14: #{conv_model_forward.19} parent=11 // pred_check_branch
        %158 = sbr.rel (%p156) target = $region16
      $region15: #{conv_model_forward.19} parent=11 // pred_region
        _
      $region16: #{conv_model_forward.19} parent=11 // pred_fallthru
        _
      // Predicated region
      $region17: #{conv_model_forward.19} parent=11 // pred_check
        %p159 = pneg %p92
      $region18: #{conv_model_forward.19} parent=11 // pred_check_branch
        %161 = sbr.rel (%p159) target = $region20
      $region19: #{conv_model_forward.19} parent=11 // pred_region
        _
      $region20: #{conv_model_forward.19} parent=11 // pred_fallthru
        _
      // Predicated region
      $region21: #{conv_model_forward.19} parent=11 // pred_check
        %p162 = pneg %p113
      $region22: #{conv_model_forward.19} parent=11 // pred_check_branch
        %164 = sbr.rel (%p162) target = $region24
      $region23: #{conv_model_forward.19} parent=11 // pred_region
        _
      $region24: #{conv_model_forward.19} parent=11 // pred_fallthru
        _
    $region12: #{conv_model_forward.19} parent=5 // pred_fallthru
      _
    %p165 = scmp.lt.s32.totalorder %s10, 8
    // Predicated region
    $region25: #{conv_model_forward.19} parent=5 // pred_check
      %p166 = pneg %p165
    $region26: #{conv_model_forward.19} parent=5 // pred_check_branch
      %168 = sbr.rel (%p166) target = $region28
    $region27: #{conv_model_forward.19} parent=5 // pred_region
      // Predicated region
      $region29: #{conv_model_forward.19} parent=27 // pred_check
        %p169 = pneg %p44
      $region30: #{conv_model_forward.19} parent=27 // pred_check_branch
        %171 = sbr.rel (%p169) target = $region32
      $region31: #{conv_model_forward.19} parent=27 // pred_region
        %s172 = smul.u32 4, %s18
        %p173 = scmp.lt.s32.totalorder %s17, 1
        %s174 = scalar_select %p173, %s17, 1
        %p175 = scmp.lt.s32.totalorder %s172, 15
        %s176 = scalar_select %p175, %s172, 15
        %s177 = smul.addr %s174, 16
        %s178 = sadd.s32 %s176, %s177
        %s179 = smul.addr %s178, 8
        %s180 = scalar_lea.vmem %s0, %s179
        %s181 = smul.u32 4, %s18
      $region32: #{conv_model_forward.19} parent=27 // pred_fallthru
        _
    $region28: #{conv_model_forward.19} parent=5 // pred_fallthru
      _
    %p182 = scmp.le.s32.totalorder 1, %s10
    %p183 = scmp.lt.s32.totalorder %s10, 9
    %p184 = pnand %p182, %p183
    %p185 = pneg %p184
    // Predicated region
    $region33: #{conv_model_forward.19} parent=5 // pred_check
      _
    $region34: #{conv_model_forward.19} parent=5 // pred_check_branch
      %187 = sbr.rel (%p184) target = $region36
    $region35: #{conv_model_forward.19} parent=5 // pred_region
      %s188 = ssub.s32 %s10, 1
      %s189 = smul.u32 4, %s20
      %p190 = scmp.lt.s32.totalorder %s19, 1
      %s191 = scalar_select %p190, %s19, 1
      %p192 = scmp.lt.s32.totalorder %s189, 15
      %s193 = scalar_select %p192, %s189, 15
      %s194 = smul.addr %s191, 16
      %s195 = sadd.s32 %s193, %s194
      %s196 = smul.addr %s195, 8
      %s197 = scalar_lea.vmem %s0, %s196
      %p198 = pneg %p50
      %p199 = pneg %p47
      %p200 = pneg %p71
      %p201 = pneg %p68
      %p202 = pneg %p92
      %p203 = pneg %p89
      %p204 = pneg %p113
      %p205 = pneg %p110
      %p206 = pneg %p141
      %p207 = pneg %p138
      %s208 = smul.u32 4, %s20
      %p209 = scmp.lt.s32.totalorder %s19, 1
      %s210 = scalar_select %p209, %s19, 1
      %p211 = scmp.lt.s32.totalorder %s208, 15
      %s212 = scalar_select %p211, %s208, 15
      %s213 = smul.addr %s210, 16
      %s214 = sadd.s32 %s212, %s213
      %s215 = smul.addr %s214, 8
      %s216 = scalar_lea.vmem %s4, %s215
      %s217 = smul.u32 4, %s20
      %p218 = scmp.lt.s32.totalorder %s19, 1
      %s219 = scalar_select %p218, %s19, 1
      %p220 = scmp.lt.s32.totalorder %s217, 15
      %s221 = scalar_select %p220, %s217, 15
      %s222 = smul.addr %s219, 16
      %s223 = sadd.s32 %s221, %s222
      %s224 = smul.addr %s223, 8
      %s225 = scalar_lea.vmem %s0, %s224
      %s226 = smul.u32 4, %s20
      %s227 = smul.u32 4, %s20
      %p228 = scmp.lt.s32.totalorder %s19, 1
      %s229 = scalar_select %p228, %s19, 1
      %p230 = scmp.lt.s32.totalorder %s227, 15
      %s231 = scalar_select %p230, %s227, 15
      %s232 = smul.addr %s229, 16
      %s233 = sadd.s32 %s231, %s232
      %s234 = smul.addr %s233, 8
      %s235 = scalar_lea.vmem %s4, %s234
      %s236 = smul.u32 4, %s20
      %v237 = vld [vmem:[%s225] sm:$0xff]
      %v238 = vld [vmem:[%s225 + $0x8] sm:$0xff]
      %v239 = vld [vmem:[%s225 + $0x10] sm:$0xff]
      %v240 = vld [vmem:[%s225 + $0x18] sm:$0xff]
      %v241 = vld [vmem:[%s1] sm:$0x1]
      %v242 = vld [vmem:[%s1 + $0x1] sm:$0x1]
      %v243 = vperm.slane %v241, 0
      %v244 = vmul.f32 %v237, %v243
      %v245 = vmul.f32 %v238, %v243
      %v246 = vmul.f32 %v239, %v243
      %v247 = vmul.f32 %v240, %v243
      %v248 = vperm.slane %v242, 0
      %v249 = vadd.f32 %v244, %v248
      %v250 = vadd.f32 %v245, %v248
      %v251 = vadd.f32 %v246, %v248
      %v252 = vadd.f32 %v247, %v248
      %v253 = vmax.f32 %v249, 0.0
      %v254 = vmax.f32 %v250, 0.0
      %v255 = vmax.f32 %v251, 0.0
      %v256 = vmax.f32 %v252, 0.0
      %v257 = vpack.c.bf16 %v254, %v253
      %v258 = vpack.c.bf16 %v256, %v255
      %v259 = vld [vmem:[%s2] sm:$0xf]
      %v260 = vld [vmem:[%s2 + $0x4] sm:$0xf]
      %v261 = vld [vmem:[%s2 + $0x8] sm:$0xf]
      %v262 = vld [vmem:[%s2 + $0xc] sm:$0xf]
      %v263 = vld [vmem:[%s2 + $0x10] sm:$0xf]
      %v264 = vld [vmem:[%s2 + $0x14] sm:$0xf]
      %v265 = vld [vmem:[%s2 + $0x18] sm:$0xf]
      %v266 = vld [vmem:[%s2 + $0x1c] sm:$0xf]
      %v267 = vld [vmem:[%s2 + $0x20] sm:$0xf]
      %v268 = vld [vmem:[%s2 + $0x24] sm:$0xf]
      %v269 = vld [vmem:[%s2 + $0x28] sm:$0xf]
      %v270 = vld [vmem:[%s2 + $0x2c] sm:$0xf]
      %v271 = vld [vmem:[%s2 + $0x30] sm:$0xf]
      %v272 = vld [vmem:[%s2 + $0x34] sm:$0xf]
      %v273 = vld [vmem:[%s2 + $0x38] sm:$0xf]
      %v274 = vld [vmem:[%s2 + $0x3c] sm:$0xf]
      %v275 = vld [vmem:[%s3] sm:$0x1]
      %v277 = vperm.slane %v275, 0
      %v295 = vunpack.c.l.b16 %v259
      %v296 = vunpack.c.l.b16 %v260
      %v297 = vunpack.c.l.b16 %v261
      %v298 = vunpack.c.l.b16 %v262
      %v299 = vunpack.c.l.b16 %v263
      %v300 = vunpack.c.l.b16 %v264
      %v301 = vunpack.c.l.b16 %v265
      %v302 = vunpack.c.l.b16 %v266
      %v303 = vunpack.c.l.b16 %v267
      %v304 = vunpack.c.l.b16 %v268
      %v305 = vunpack.c.l.b16 %v269
      %v306 = vunpack.c.l.b16 %v270
      %v307 = vunpack.c.l.b16 %v271
      %v308 = vunpack.c.l.b16 %v272
      %v309 = vunpack.c.l.b16 %v273
      %v310 = vunpack.c.l.b16 %v274
      %v311 = vpack.c.b16 %v296, %v295
      %v312 = vpack.c.b16 %v298, %v297
      %v313 = vpack.c.b16 %v300, %v299
      %v314 = vpack.c.b16 %v302, %v301
      %v315 = vpack.c.b16 %v304, %v303
      %v316 = vpack.c.b16 %v306, %v305
      %v317 = vpack.c.b16 %v308, %v307
      %v318 = vpack.c.b16 %v310, %v309
      %327 = vmatpush.bf16.msra.mxu0 %v318
      %328 = vmatpush.bf16.msra.mxu0 %v317
      %329 = vmatpush.bf16.msra.mxu0 %v316
      %330 = vmatpush.bf16.msra.mxu0 %v315
      %331 = vmatpush.bf16.msra.mxu0 %v314
      %332 = vmatpush.bf16.msra.mxu0 %v313
      %333 = vmatpush.bf16.msra.mxu0 %v312
      %334 = vmatpush.bf16.msra.mxu0 %v311
      %335 = vmatmul.bf16.gmra.mxu0 %v257
      %v336 = vpop.f32.mrf.mxu0
      %v337 = vadd.f32 %v277, %v336
      %v338 = vpop.f32.mrf.mxu0
      %v339 = vadd.f32 %v277, %v338
      %340 = vmatmul.bf16.gmra.mxu0 %v258
      %v341 = vpop.f32.mrf.mxu0
      %v342 = vadd.f32 %v277, %v341
      %v343 = vpop.f32.mrf.mxu0
      %v344 = vadd.f32 %v277, %v343
      %345 = vdwg.mxu0
      %346 = vst [vmem:[%s235] sm:$0xff] %v337
      %347 = vst [vmem:[%s235 + $0x8] sm:$0xff] %v339
      %348 = vst [vmem:[%s235 + $0x10] sm:$0xff] %v342
      %349 = vst [vmem:[%s235 + $0x18] sm:$0xff] %v344
      %s350 = smul.u32 4, %s20
      %p351 = scmp.lt.s32.totalorder %s19, 1
      %s352 = scalar_select %p351, %s19, 1
      %p353 = scmp.lt.s32.totalorder %s350, 15
      %s354 = scalar_select %p353, %s350, 15
      %s355 = smul.addr %s352, 16
      %s356 = sadd.s32 %s354, %s355
      %s357 = smul.addr %s356, 8
      %s358 = scalar_lea.vmem %s4, %s357
      // Predicated region
      $region37: #{conv_model_forward.19} parent=35 // pred_check
        %p359 = pneg %p138
      $region38: #{conv_model_forward.19} parent=35 // pred_check_branch
        %361 = sbr.rel (%p359) target = $region40
      $region39: #{conv_model_forward.19} parent=35 // pred_region
        %s362 = smul.u32 4, %s20
      $region40: #{conv_model_forward.19} parent=35 // pred_fallthru
        _
    $region36: #{conv_model_forward.19} parent=5 // pred_fallthru
      _
    %p363 = scmp.le.s32.totalorder 2, %s10
    // Predicated region
    $region41: #{conv_model_forward.19} parent=5 // pred_check
      %p364 = pneg %p363
    $region42: #{conv_model_forward.19} parent=5 // pred_check_branch
      %366 = sbr.rel (%p364) target = $region44
    $region43: #{conv_model_forward.19} parent=5 // pred_region
      %s367 = ssub.s32 %s10, 2
      // Predicated region
      $region45: #{conv_model_forward.19} parent=43 // pred_check
        %p368 = pneg %p144
      $region46: #{conv_model_forward.19} parent=43 // pred_check_branch
        %370 = sbr.rel (%p368) target = $region48
      $region47: #{conv_model_forward.19} parent=43 // pred_region
        %s371 = smul.u32 4, %s22
        %p372 = scmp.lt.s32.totalorder %s21, 1
        %s373 = scalar_select %p372, %s21, 1
        %p374 = scmp.lt.s32.totalorder %s371, 15
        %s375 = scalar_select %p374, %s371, 15
        %s376 = smul.addr %s373, 16
        %s377 = sadd.s32 %s375, %s376
        %s378 = smul.addr %s377, 8
        %s379 = scalar_lea.vmem %s4, %s378
      $region48: #{conv_model_forward.19} parent=43 // pred_fallthru
        _
    $region44: #{conv_model_forward.19} parent=5 // pred_fallthru
      _
  $region6: #{conv_model_forward.19} parent=0 // loop_footer
    %s14 = sadd.s32 1, %s10
  $region7: #{conv_model_forward.19} parent=0 // loop_footer_branch
    %9 = sbr.rel target = $region3
  $region8: #{conv_model_forward.19} parent=0 // loop_exit
    _

// kernel: conv_model_forward.10
$region0: #{conv_model_forward.10}
  #allocation0 [shape = 'u32[]', space=smem, size = 0x4, offset = 0x4, fixed_abs, tag = 'smem constant byte address 0x4 - core index']
  #allocation1 [shape = 'u32[72,128]{1,0:T(1,128)}', space=vmem, size = 0x9000, scoped, tag = 'internal scratch']
  #allocation2 [shape = 'f32[1,128]{1,0:T(1,128)}', space=vmem, size = 0x200, scoped, tag = 'scratch operand']
  %s0 = inlined_call_operand.vmem [shape: f32[2,128,128], index: 0, kind: input, shape index: {}]
  %s1 = inlined_call_operand.vmem [shape: f32[2,128], index: 1, kind: input, shape index: {}]
  %s2 = inlined_call_operand.vmem [shape: bf16[2,128,128], index: 2, kind: input, shape index: {}]
  %s3 = inlined_call_operand.vmem [shape: f32[1,128], index: 3, kind: input, shape index: {}]
  %s4 = inlined_call_operand.vmem [shape: f32[2,128,128], index: 4, kind: output, shape index: {0}]
  %s5 = inlined_call_operand.vmem [shape: f32[2,2,128], index: 5, kind: output, shape index: {1}]
  %6 = xla_tuple %s4, %s5
  %s7 = sld [smem:[#allocation0]]
  $region65: #{conv_model_forward.10} parent=0
    _
  %s9 = ssub.s32 1, %s7
  %s10 = scalar_select 0, %s9, %s7
  loop: start=0, step=1, limit=10
  $region2: #{conv_model_forward.10} parent=0 // loop_pre_header
    _
  $region3: #{conv_model_forward.10} parent=0 // loop_header
    %s12 = sphi 0, %s16
    %p13 = scmp.ge.s32.totalorder %s12, 10
    %s19 = sphi 0, %s31
    %s20 = sphi 0, %s27
    %s21 = sphi 0, %s19
    %s22 = sphi 0, %s20
    %s23 = sphi 0, %s21
    %s24 = sphi 0, %s22
    %s36 = sphi 0, %s38
    %s39 = sphi 0, %s36
    %s40 = sphi 0, %s39
    %s56 = sphi 0, %s40
    %s60 = sphi 0, %s60
    %s62 = sphi 0, %s60
    %s63 = sphi 0, %s62
    %s77 = sphi 0, %s63
    %s81 = sphi 0, %s81
    %s83 = sphi 0, %s81
    %s84 = sphi 0, %s83
    %s98 = sphi 0, %s84
    %s102 = sphi 0, %s102
    %s104 = sphi 0, %s102
    %s105 = sphi 0, %s104
    %s119 = sphi 0, %s105
    %s127 = sphi 0, %s129
    %s130 = sphi 0, %s127
    %s131 = sphi 0, %s130
    %s147 = sphi 0, %s131
    %s153 = sphi 0, %s155
    %s156 = sphi 0, %s153
    %s157 = sphi 0, %s156
    %s173 = sphi 0, %s157
  $region4: #{conv_model_forward.10} parent=0 // loop_header_branch
    %15 = sbr.rel (%p13) target = $region8
  $region5: #{conv_model_forward.10} parent=0 // loop_body
    %s17 = ssub.s32 %s12, 1
    %s18 = ssub.s32 %s12, 2
    %s25 = sadd.s32 1, %s20
    %p26 = scmp.ge.s32.totalorder %s25, 4
    %s27 = scalar_select %p26, 0, %s25
    %s28 = sadd.s32 1, %s19
    %s29 = scalar_select %p26, %s28, %s19
    %p30 = scmp.ge.s32.totalorder %s29, 2
    %s31 = scalar_select %p30, 0, %s29
    %s32 = ssub.s32 %s19, %s31
    %s33 = ssub.s32 %s20, %s27
    %s34 = sor.u32 %s32, %s33
    %p35 = scmp.eq.s32.totalorder %s34, 0
    %s37 = sadd.s32 %s36, 1
    %s38 = scalar_select %p35, %s36, %s37
    %p41 = pneg %p35
    %p42 = scmp.eq.s32.totalorder %s12, 7
    %p43 = por %p41, %p42
    %p44 = scmp.ne.s32.totalorder %s36, %s39
    %p45 = scmp.eq.s32.totalorder %s12, 0
    %p46 = por %p44, %p45
    %p47 = scmp.ne.s32.totalorder %s36, %s39
    %p48 = scmp.eq.s32.totalorder %s17, 7
    %p49 = por %p47, %p48
    %p50 = scmp.ne.s32.totalorder %s39, %s40
    %p51 = scmp.eq.s32.totalorder %s17, 0
    %p52 = por %p50, %p51
    %p53 = scmp.ne.s32.totalorder %s39, %s40
    %p54 = scmp.eq.s32.totalorder %s18, 7
    %p55 = por %p53, %p54
    %p57 = scmp.ne.s32.totalorder %s40, %s56
    %p58 = scmp.eq.s32.totalorder %s18, 0
    %p59 = por %p57, %p58
    %s61 = sadd.s32 %s60, 1
    %p64 = scmp.eq.s32.totalorder %s12, 7
    %p65 = scmp.ne.s32.totalorder %s60, %s62
    %p66 = scmp.eq.s32.totalorder %s12, 0
    %p67 = por %p65, %p66
    %p68 = scmp.ne.s32.totalorder %s60, %s62
    %p69 = scmp.eq.s32.totalorder %s17, 7
    %p70 = por %p68, %p69
    %p71 = scmp.ne.s32.totalorder %s62, %s63
    %p72 = scmp.eq.s32.totalorder %s17, 0
    %p73 = por %p71, %p72
    %p74 = scmp.ne.s32.totalorder %s62, %s63
    %p75 = scmp.eq.s32.totalorder %s18, 7
    %p76 = por %p74, %p75
    %p78 = scmp.ne.s32.totalorder %s63, %s77
    %p79 = scmp.eq.s32.totalorder %s18, 0
    %p80 = por %p78, %p79
    %s82 = sadd.s32 %s81, 1
    %p85 = scmp.eq.s32.totalorder %s12, 7
    %p86 = scmp.ne.s32.totalorder %s81, %s83
    %p87 = scmp.eq.s32.totalorder %s12, 0
    %p88 = por %p86, %p87
    %p89 = scmp.ne.s32.totalorder %s81, %s83
    %p90 = scmp.eq.s32.totalorder %s17, 7
    %p91 = por %p89, %p90
    %p92 = scmp.ne.s32.totalorder %s83, %s84
    %p93 = scmp.eq.s32.totalorder %s17, 0
    %p94 = por %p92, %p93
    %p95 = scmp.ne.s32.totalorder %s83, %s84
    %p96 = scmp.eq.s32.totalorder %s18, 7
    %p97 = por %p95, %p96
    %p99 = scmp.ne.s32.totalorder %s84, %s98
    %p100 = scmp.eq.s32.totalorder %s18, 0
    %p101 = por %p99, %p100
    %s103 = sadd.s32 %s102, 1
    %p106 = scmp.eq.s32.totalorder %s12, 7
    %p107 = scmp.ne.s32.totalorder %s102, %s104
    %p108 = scmp.eq.s32.totalorder %s12, 0
    %p109 = por %p107, %p108
    %p110 = scmp.ne.s32.totalorder %s102, %s104
    %p111 = scmp.eq.s32.totalorder %s17, 7
    %p112 = por %p110, %p111
    %p113 = scmp.ne.s32.totalorder %s104, %s105
    %p114 = scmp.eq.s32.totalorder %s17, 0
    %p115 = por %p113, %p114
    %p116 = scmp.ne.s32.totalorder %s104, %s105
    %p117 = scmp.eq.s32.totalorder %s18, 7
    %p118 = por %p116, %p117
    %p120 = scmp.ne.s32.totalorder %s105, %s119
    %p121 = scmp.eq.s32.totalorder %s18, 0
    %p122 = por %p120, %p121
    %s123 = ssub.s32 %s19, %s31
    %s124 = ssub.s32 %s20, %s27
    %s125 = sor.u32 %s123, %s124
    %p126 = scmp.eq.s32.totalorder %s125, 0
    %s128 = sadd.s32 %s127, 1
    %s129 = scalar_select %p126, %s127, %s128
    %p132 = pneg %p126
    %p133 = scmp.eq.s32.totalorder %s12, 7
    %p134 = por %p132, %p133
    %p135 = scmp.ne.s32.totalorder %s127, %s130
    %p136 = scmp.eq.s32.totalorder %s12, 0
    %p137 = por %p135, %p136
    %p138 = scmp.ne.s32.totalorder %s127, %s130
    %p139 = scmp.eq.s32.totalorder %s17, 7
    %p140 = por %p138, %p139
    %p141 = scmp.ne.s32.totalorder %s130, %s131
    %p142 = scmp.eq.s32.totalorder %s17, 0
    %p143 = por %p141, %p142
    %p144 = scmp.ne.s32.totalorder %s130, %s131
    %p145 = scmp.eq.s32.totalorder %s18, 7
    %p146 = por %p144, %p145
    %p148 = scmp.ne.s32.totalorder %s131, %s147
    %p149 = scmp.eq.s32.totalorder %s18, 0
    %p150 = por %p148, %p149
    %s151 = ssub.s32 %s19, %s31
    %p152 = scmp.eq.s32.totalorder %s151, 0
    %s154 = sadd.s32 %s153, 1
    %s155 = scalar_select %p152, %s153, %s154
    %p158 = pneg %p152
    %p159 = scmp.eq.s32.totalorder %s12, 7
    %p160 = por %p158, %p159
    %p161 = scmp.ne.s32.totalorder %s153, %s156
    %p162 = scmp.eq.s32.totalorder %s12, 0
    %p163 = por %p161, %p162
    %p164 = scmp.ne.s32.totalorder %s153, %s156
    %p165 = scmp.eq.s32.totalorder %s17, 7
    %p166 = por %p164, %p165
    %p167 = scmp.ne.s32.totalorder %s156, %s157
    %p168 = scmp.eq.s32.totalorder %s17, 0
    %p169 = por %p167, %p168
    %p170 = scmp.ne.s32.totalorder %s156, %s157
    %p171 = scmp.eq.s32.totalorder %s18, 7
    %p172 = por %p170, %p171
    %p174 = scmp.ne.s32.totalorder %s157, %s173
    %p175 = scmp.eq.s32.totalorder %s18, 0
    %p176 = por %p174, %p175
    %p177 = scmp.le.s32.totalorder 1, %s12
    %p178 = scmp.lt.s32.totalorder %s12, 9
    %p179 = pnand %p177, %p178
    %p180 = pneg %p179
    // Predicated region
    $region9: #{conv_model_forward.10} parent=5 // pred_check
      _
    $region10: #{conv_model_forward.10} parent=5 // pred_check_branch
      %182 = sbr.rel (%p179) target = $region12
    $region11: #{conv_model_forward.10} parent=5 // pred_region
      %s183 = ssub.s32 %s12, 1
      // Predicated region
      $region13: #{conv_model_forward.10} parent=11 // pred_check
        %p184 = pneg %p73
      $region14: #{conv_model_forward.10} parent=11 // pred_check_branch
        %186 = sbr.rel (%p184) target = $region16
      $region15: #{conv_model_forward.10} parent=11 // pred_region
        _
      $region16: #{conv_model_forward.10} parent=11 // pred_fallthru
        _
      // Predicated region
      $region17: #{conv_model_forward.10} parent=11 // pred_check
        %p187 = pneg %p94
      $region18: #{conv_model_forward.10} parent=11 // pred_check_branch
        %189 = sbr.rel (%p187) target = $region20
      $region19: #{conv_model_forward.10} parent=11 // pred_region
        _
      $region20: #{conv_model_forward.10} parent=11 // pred_fallthru
        _
      // Predicated region
      $region21: #{conv_model_forward.10} parent=11 // pred_check
        %p190 = pneg %p115
      $region22: #{conv_model_forward.10} parent=11 // pred_check_branch
        %192 = sbr.rel (%p190) target = $region24
      $region23: #{conv_model_forward.10} parent=11 // pred_region
        _
      $region24: #{conv_model_forward.10} parent=11 // pred_fallthru
        _
    $region12: #{conv_model_forward.10} parent=5 // pred_fallthru
      _
    %p193 = scmp.lt.s32.totalorder %s12, 8
    // Predicated region
    $region25: #{conv_model_forward.10} parent=5 // pred_check
      %p194 = pneg %p193
    $region26: #{conv_model_forward.10} parent=5 // pred_check_branch
      %196 = sbr.rel (%p194) target = $region28
    $region27: #{conv_model_forward.10} parent=5 // pred_region
      // Predicated region
      $region29: #{conv_model_forward.10} parent=27 // pred_check
        %p197 = pneg %p46
      $region30: #{conv_model_forward.10} parent=27 // pred_check_branch
        %199 = sbr.rel (%p197) target = $region32
      $region31: #{conv_model_forward.10} parent=27 // pred_region
        %s200 = smul.u32 4, %s20
        %p201 = scmp.lt.s32.totalorder %s19, 1
        %s202 = scalar_select %p201, %s19, 1
        %p203 = scmp.lt.s32.totalorder %s200, 15
        %s204 = scalar_select %p203, %s200, 15
        %s205 = smul.addr %s202, 16
        %s206 = sadd.s32 %s204, %s205
        %s207 = smul.addr %s206, 8
        %s208 = scalar_lea.vmem %s0, %s207
        %s209 = smul.u32 4, %s20
      $region32: #{conv_model_forward.10} parent=27 // pred_fallthru
        _
    $region28: #{conv_model_forward.10} parent=5 // pred_fallthru
      _
    %p210 = scmp.le.s32.totalorder 1, %s12
    %p211 = scmp.lt.s32.totalorder %s12, 9
    %p212 = pnand %p210, %p211
    %p213 = pneg %p212
    // Predicated region
    $region33: #{conv_model_forward.10} parent=5 // pred_check
      _
    $region34: #{conv_model_forward.10} parent=5 // pred_check_branch
      %215 = sbr.rel (%p212) target = $region36
    $region35: #{conv_model_forward.10} parent=5 // pred_region
      %s216 = ssub.s32 %s12, 1
      %s217 = smul.u32 4, %s22
      %p218 = scmp.lt.s32.totalorder %s21, 1
      %s219 = scalar_select %p218, %s21, 1
      %p220 = scmp.lt.s32.totalorder %s217, 15
      %s221 = scalar_select %p220, %s217, 15
      %s222 = smul.addr %s219, 16
      %s223 = sadd.s32 %s221, %s222
      %s224 = smul.addr %s223, 8
      %s225 = scalar_lea.vmem %s0, %s224
      %p226 = pneg %p52
      %p227 = pneg %p49
      %p228 = pneg %p73
      %p229 = pneg %p70
      %p230 = pneg %p94
      %p231 = pneg %p91
      %p232 = pneg %p115
      %p233 = pneg %p112
      %p234 = pneg %p143
      %p235 = pneg %p140
      %s236 = smul.u32 4, %s22
      %p237 = scmp.lt.s32.totalorder %s21, 1
      %s238 = scalar_select %p237, %s21, 1
      %p239 = scmp.lt.s32.totalorder %s236, 15
      %s240 = scalar_select %p239, %s236, 15
      %s241 = smul.addr %s238, 16
      %s242 = sadd.s32 %s240, %s241
      %s243 = smul.addr %s242, 8
      %s244 = scalar_lea.vmem %s4, %s243
      %p245 = pneg %p169
      %p246 = pneg %p166
      %p247 = scmp.lt.s32.totalorder %s21, 1
      %s248 = scalar_select %p247, %s21, 1
      %s249 = smul.addr %s248, 2
      %s250 = scalar_lea.vmem %s5, %s249
      %s251 = smul.u32 4, %s22
      %p252 = scmp.lt.s32.totalorder %s21, 1
      %s253 = scalar_select %p252, %s21, 1
      %p254 = scmp.lt.s32.totalorder %s251, 15
      %s255 = scalar_select %p254, %s251, 15
      %s256 = smul.addr %s253, 16
      %s257 = sadd.s32 %s255, %s256
      %s258 = smul.addr %s257, 8
      %s259 = scalar_lea.vmem %s0, %s258
      %s260 = smul.u32 4, %s22
      %s261 = smul.u32 4, %s22
      %p262 = scmp.lt.s32.totalorder %s21, 1
      %s263 = scalar_select %p262, %s21, 1
      %p264 = scmp.lt.s32.totalorder %s261, 15
      %s265 = scalar_select %p264, %s261, 15
      %s266 = smul.addr %s263, 16
      %s267 = sadd.s32 %s265, %s266
      %s268 = smul.addr %s267, 8
      %s269 = scalar_lea.vmem %s4, %s268
      %s270 = smul.u32 4, %s22
      %p271 = scmp.lt.s32.totalorder %s21, 1
      %s272 = scalar_select %p271, %s21, 1
      %s273 = smul.addr %s272, 2
      %s274 = scalar_lea.vmem %s5, %s273
      %p275 = scmp.eq.s32.totalorder %s22, 0
      // Predicated region
      $region37: #{conv_model_forward.10} parent=35 // pred_check
        %p276 = pneg %p275
      $region38: #{conv_model_forward.10} parent=35 // pred_check_branch
        %278 = sbr.rel (%p276) target = $region40
      $region39: #{conv_model_forward.10} parent=35 // pred_region
        %279 = vst [vmem:[#allocation2] sm:$0x1] 0.0
      $region40: #{conv_model_forward.10} parent=35 // pred_fallthru
        _
      %v280 = vld [vmem:[%s259] sm:$0xff]
      %v281 = vld [vmem:[%s259 + $0x8] sm:$0xff]
      %v282 = vld [vmem:[%s259 + $0x10] sm:$0xff]
      %v283 = vld [vmem:[%s259 + $0x18] sm:$0xff]
      %v284 = vld [vmem:[%s1] sm:$0x1]
      %v285 = vld [vmem:[%s1 + $0x1] sm:$0x1]
      %v286 = vperm.slane %v284, 0
      %v287 = vmul.f32 %v280, %v286
      %v288 = vmul.f32 %v281, %v286
      %v289 = vmul.f32 %v282, %v286
      %v290 = vmul.f32 %v283, %v286
      %v291 = vperm.slane %v285, 0
      %v292 = vadd.f32 %v287, %v291
      %v293 = vadd.f32 %v288, %v291
      %v294 = vadd.f32 %v289, %v291
      %v295 = vadd.f32 %v290, %v291
      %v296 = vlaneseq
      %v297 = vshrl.u32 %v296, 7
      %v298 = vadd.s32 %v297, 8
      %v299 = vadd.s32 %v297, 16
      %v300 = vadd.s32 %v297, 24
      %v301 = vrot.slane %v292, 7
      %v302 = vrot.slane %v293, 7
      %v303 = vrot.slane %v294, 7
      %v304 = vrot.slane %v295, 7
      %vm305 = vcmp.lt.s32.totalorder %v297, 1
      %v306 = vsel %vm305, %v303, %v304
      %v307 = vsel %vm305, %v302, %v303
      %v308 = vsel %vm305, %v301, %v302
      %v309 = vsel %vm305, %v304, %v301
      %v310 = vld [vmem:[#allocation2] sm:$0x1]
      %vm311 = vcmp.eq.s32.totalorder %v297, 0
      %vm312 = vcmp.eq.s32.totalorder %v298, 0
      %vm313 = vcmp.eq.s32.totalorder %v299, 0
      %vm314 = vcmp.eq.s32.totalorder %v300, 0
      %v316 = vperm.slane %v310, 0
      %v318 = vsel %vm311, 1, 0
      %v319 = vsel %vm312, 1, 0
      %v320 = vsel %vm313, 1, 0
      %v321 = vsel %vm314, 1, 0
      %vm322 = vcmp.eq.s32.totalorder %v318, 1
      %vm323 = vcmp.eq.s32.totalorder %v319, 1
      %vm324 = vcmp.eq.s32.totalorder %v320, 1
      %vm325 = vcmp.eq.s32.totalorder %v321, 1
      %v326 = vsel %vm322, %v316, %v309
      %v327 = vsel %vm323, %v316, %v308
      %v328 = vsel %vm324, %v316, %v307
      %v329 = vsel %vm325, %v316, %v306
      %v330 = vpack.c.bf16 %v327, %v326
      %v331 = vpack.c.bf16 %v329, %v328
      %v332 = vld [vmem:[%s2] sm:$0xf]
      %v333 = vld [vmem:[%s2 + $0x4] sm:$0xf]
      %v334 = vld [vmem:[%s2 + $0x8] sm:$0xf]
      %v335 = vld [vmem:[%s2 + $0xc] sm:$0xf]
      %v336 = vld [vmem:[%s2 + $0x10] sm:$0xf]
      %v337 = vld [vmem:[%s2 + $0x14] sm:$0xf]
      %v338 = vld [vmem:[%s2 + $0x18] sm:$0xf]
      %v339 = vld [vmem:[%s2 + $0x1c] sm:$0xf]
      %v340 = vld [vmem:[%s2 + $0x20] sm:$0xf]
      %v341 = vld [vmem:[%s2 + $0x24] sm:$0xf]
      %v342 = vld [vmem:[%s2 + $0x28] sm:$0xf]
      %v343 = vld [vmem:[%s2 + $0x2c] sm:$0xf]
      %v344 = vld [vmem:[%s2 + $0x30] sm:$0xf]
      %v345 = vld [vmem:[%s2 + $0x34] sm:$0xf]
      %v346 = vld [vmem:[%s2 + $0x38] sm:$0xf]
      %v347 = vld [vmem:[%s2 + $0x3c] sm:$0xf]
      %v348 = vpack.c.bf16 %v293, %v292
      %v349 = vpack.c.bf16 %v295, %v294
      %s350 = scalar_lea.vmem %s2, 64
      %v351 = vld [vmem:[%s350] sm:$0xf]
      %v352 = vld [vmem:[%s350 + $0x4] sm:$0xf]
      %v353 = vld [vmem:[%s350 + $0x8] sm:$0xf]
      %v354 = vld [vmem:[%s350 + $0xc] sm:$0xf]
      %v355 = vld [vmem:[%s350 + $0x10] sm:$0xf]
      %v356 = vld [vmem:[%s350 + $0x14] sm:$0xf]
      %v357 = vld [vmem:[%s350 + $0x18] sm:$0xf]
      %v358 = vld [vmem:[%s350 + $0x1c] sm:$0xf]
      %v359 = vld [vmem:[%s350 + $0x20] sm:$0xf]
      %v360 = vld [vmem:[%s350 + $0x24] sm:$0xf]
      %v361 = vld [vmem:[%s350 + $0x28] sm:$0xf]
      %v362 = vld [vmem:[%s350 + $0x2c] sm:$0xf]
      %v363 = vld [vmem:[%s350 + $0x30] sm:$0xf]
      %v364 = vld [vmem:[%s350 + $0x34] sm:$0xf]
      %v365 = vld [vmem:[%s350 + $0x38] sm:$0xf]
      %v366 = vld [vmem:[%s350 + $0x3c] sm:$0xf]
      %v383 = vunpack.c.l.b16 %v351
      %v384 = vunpack.c.l.b16 %v352
      %v385 = vunpack.c.l.b16 %v353
      %v386 = vunpack.c.l.b16 %v354
      %v387 = vunpack.c.l.b16 %v355
      %v388 = vunpack.c.l.b16 %v356
      %v389 = vunpack.c.l.b16 %v357
      %v390 = vunpack.c.l.b16 %v358
      %v391 = vunpack.c.l.b16 %v359
      %v392 = vunpack.c.l.b16 %v360
      %v393 = vunpack.c.l.b16 %v361
      %v394 = vunpack.c.l.b16 %v362
      %v395 = vunpack.c.l.b16 %v363
      %v396 = vunpack.c.l.b16 %v364
      %v397 = vunpack.c.l.b16 %v365
      %v398 = vunpack.c.l.b16 %v366
      %v399 = vpack.c.b16 %v384, %v383
      %v400 = vpack.c.b16 %v386, %v385
      %v401 = vpack.c.b16 %v388, %v387
      %v402 = vpack.c.b16 %v390, %v389
      %v403 = vpack.c.b16 %v392, %v391
      %v404 = vpack.c.b16 %v394, %v393
      %v405 = vpack.c.b16 %v396, %v395
      %v406 = vpack.c.b16 %v398, %v397
      %415 = vmatpush.bf16.msra.mxu0 %v406
      %416 = vmatpush.bf16.msra.mxu0 %v405
      %417 = vmatpush.bf16.msra.mxu0 %v404
      %418 = vmatpush.bf16.msra.mxu0 %v403
      %419 = vmatpush.bf16.msra.mxu0 %v402
      %420 = vmatpush.bf16.msra.mxu0 %v401
      %421 = vmatpush.bf16.msra.mxu0 %v400
      %422 = vmatpush.bf16.msra.mxu0 %v399
      %423 = vmatmul.bf16.gmra.mxu0 %v348
      %v424 = vpop.f32.mrf.mxu0
      %v425 = vadd.f32 0.0, %v424
      %v426 = vpop.f32.mrf.mxu0
      %v427 = vadd.f32 0.0, %v426
      %428 = vmatmul.bf16.gmra.mxu0 %v349
      %v429 = vpop.f32.mrf.mxu0
      %v430 = vadd.f32 0.0, %v429
      %v431 = vpop.f32.mrf.mxu0
      %v432 = vadd.f32 0.0, %v431
      %433 = vdwg.mxu0
      %v450 = vunpack.c.l.b16 %v332
      %v451 = vunpack.c.l.b16 %v333
      %v452 = vunpack.c.l.b16 %v334
      %v453 = vunpack.c.l.b16 %v335
      %v454 = vunpack.c.l.b16 %v336
      %v455 = vunpack.c.l.b16 %v337
      %v456 = vunpack.c.l.b16 %v338
      %v457 = vunpack.c.l.b16 %v339
      %v458 = vunpack.c.l.b16 %v340
      %v459 = vunpack.c.l.b16 %v341
      %v460 = vunpack.c.l.b16 %v342
      %v461 = vunpack.c.l.b16 %v343
      %v462 = vunpack.c.l.b16 %v344
      %v463 = vunpack.c.l.b16 %v345
      %v464 = vunpack.c.l.b16 %v346
      %v465 = vunpack.c.l.b16 %v347
      %v466 = vpack.c.b16 %v451, %v450
      %v467 = vpack.c.b16 %v453, %v452
      %v468 = vpack.c.b16 %v455, %v454
      %v469 = vpack.c.b16 %v457, %v456
      %v470 = vpack.c.b16 %v459, %v458
      %v471 = vpack.c.b16 %v461, %v460
      %v472 = vpack.c.b16 %v463, %v462
      %v473 = vpack.c.b16 %v465, %v464
      %482 = vmatpush.bf16.msra.mxu0 %v473
      %483 = vmatpush.bf16.msra.mxu0 %v472
      %484 = vmatpush.bf16.msra.mxu0 %v471
      %485 = vmatpush.bf16.msra.mxu0 %v470
      %486 = vmatpush.bf16.msra.mxu0 %v469
      %487 = vmatpush.bf16.msra.mxu0 %v468
      %488 = vmatpush.bf16.msra.mxu0 %v467
      %489 = vmatpush.bf16.msra.mxu0 %v466
      %490 = vmatmul.bf16.gmra.mxu0 %v330
      %v491 = vpop.f32.mrf.mxu0
      %v492 = vadd.f32 %v425, %v491
      %v493 = vpop.f32.mrf.mxu0
      %v494 = vadd.f32 %v427, %v493
      %495 = vmatmul.bf16.gmra.mxu0 %v331
      %v496 = vpop.f32.mrf.mxu0
      %v497 = vadd.f32 %v430, %v496
      %v498 = vpop.f32.mrf.mxu0
      %v499 = vadd.f32 %v432, %v498
      %500 = vdwg.mxu0
      %v501 = vld [vmem:[%s3] sm:$0x1]
      %v503 = vperm.slane %v501, 0
      %v505 = vadd.f32 %v492, %v503
      %v506 = vadd.f32 %v494, %v503
      %v507 = vadd.f32 %v497, %v503
      %v508 = vadd.f32 %v499, %v503
      %509 = vst [vmem:[%s269] sm:$0xff] %v505
      %510 = vst [vmem:[%s269 + $0x8] sm:$0xff] %v506
      %511 = vst [vmem:[%s269 + $0x10] sm:$0xff] %v507
      %512 = vst [vmem:[%s269 + $0x18] sm:$0xff] %v508
      // Predicated region
      $region41: #{conv_model_forward.10} parent=35 // pred_check
        %p513 = pneg %p275
      $region42: #{conv_model_forward.10} parent=35 // pred_check_branch
        %515 = sbr.rel (%p513) target = $region44
      $region43: #{conv_model_forward.10} parent=35 // pred_region
        %516 = vst [vmem:[%s274] sm:$0x3] 0.0
      $region44: #{conv_model_forward.10} parent=35 // pred_fallthru
        _
      %v517 = vadd.f32 %v505, %v506
      %v518 = vadd.f32 %v517, %v507
      %v519 = vadd.f32 %v518, %v508
      %v520 = vrot.slane %v519, 4
      %v521 = vadd.f32 %v519, %v520
      %v522 = vrot.slane %v521, 2
      %v523 = vadd.f32 %v521, %v522
      %v524 = vrot.slane %v523, 1
      %v525 = vadd.f32 %v523, %v524
      %v526 = vmul.f32 %v505, %v505
      %v527 = vmul.f32 %v506, %v506
      %v528 = vmul.f32 %v507, %v507
      %v529 = vmul.f32 %v508, %v508
      %v530 = vadd.f32 %v526, %v527
      %v531 = vadd.f32 %v530, %v528
      %v532 = vadd.f32 %v531, %v529
      %v533 = vrot.slane %v532, 4
      %v534 = vadd.f32 %v532, %v533
      %v535 = vrot.slane %v534, 2
      %v536 = vadd.f32 %v534, %v535
      %v537 = vrot.slane %v536, 1
      %v538 = vadd.f32 %v536, %v537
      %v539 = vld [vmem:[%s274] sm:$0x3]
      %vm540 = vcmask 1040384
      %v541 = vsel %vm540, %v525, %v538
      %v542 = vadd.f32 %v539, %v541
      %543 = vst [vmem:[%s274] sm:$0x3] %v542
      %544 = vst [vmem:[#allocation2 - $0x7] sm:$0x80] %v295
      %s545 = smul.u32 4, %s22
      %p546 = scmp.lt.s32.totalorder %s21, 1
      %s547 = scalar_select %p546, %s21, 1
      %p548 = scmp.lt.s32.totalorder %s545, 15
      %s549 = scalar_select %p548, %s545, 15
      %s550 = smul.addr %s547, 16
      %s551 = sadd.s32 %s549, %s550
      %s552 = smul.addr %s551, 8
      %s553 = scalar_lea.vmem %s4, %s552
      %p554 = scmp.lt.s32.totalorder %s21, 1
      %s555 = scalar_select %p554, %s21, 1
      %s556 = smul.addr %s555, 2
      %s557 = scalar_lea.vmem %s5, %s556
      // Predicated region
      $region45: #{conv_model_forward.10} parent=35 // pred_check
        %p558 = pneg %p140
      $region46: #{conv_model_forward.10} parent=35 // pred_check_branch
        %560 = sbr.rel (%p558) target = $region48
      $region47: #{conv_model_forward.10} parent=35 // pred_region
        %s561 = smul.u32 4, %s22
      $region48: #{conv_model_forward.10} parent=35 // pred_fallthru
        _
      // Predicated region
      $region49: #{conv_model_forward.10} parent=35 // pred_check
        %p562 = pneg %p166
      $region50: #{conv_model_forward.10} parent=35 // pred_check_branch
        %564 = sbr.rel (%p562) target = $region52
      $region51: #{conv_model_forward.10} parent=35 // pred_region
        _
      $region52: #{conv_model_forward.10} parent=35 // pred_fallthru
        _
    $region36: #{conv_model_forward.10} parent=5 // pred_fallthru
      _
    %p565 = scmp.le.s32.totalorder 2, %s12
    // Predicated region
    $region53: #{conv_model_forward.10} parent=5 // pred_check
      %p566 = pneg %p565
    $region54: #{conv_model_forward.10} parent=5 // pred_check_branch
      %568 = sbr.rel (%p566) target = $region56
    $region55: #{conv_model_forward.10} parent=5 // pred_region
      %s569 = ssub.s32 %s12, 2
      // Predicated region
      $region57: #{conv_model_forward.10} parent=55 // pred_check
        %p570 = pneg %p146
      $region58: #{conv_model_forward.10} parent=55 // pred_check_branch
        %572 = sbr.rel (%p570) target = $region60
      $region59: #{conv_model_forward.10} parent=55 // pred_region
        %s573 = smul.u32 4, %s24
        %p574 = scmp.lt.s32.totalorder %s23, 1
        %s575 = scalar_select %p574, %s23, 1
        %p576 = scmp.lt.s32.totalorder %s573, 15
        %s577 = scalar_select %p576, %s573, 15
        %s578 = smul.addr %s575, 16
        %s579 = sadd.s32 %s577, %s578
        %s580 = smul.addr %s579, 8
        %s581 = scalar_lea.vmem %s4, %s580
      $region60: #{conv_model_forward.10} parent=55 // pred_fallthru
        _
      // Predicated region
      $region61: #{conv_model_forward.10} parent=55 // pred_check
        %p582 = pneg %p172
      $region62: #{conv_model_forward.10} parent=55 // pred_check_branch
        %584 = sbr.rel (%p582) target = $region64
      $region63: #{conv_model_forward.10} parent=55 // pred_region
        %p585 = scmp.lt.s32.totalorder %s23, 1
        %s586 = scalar_select %p585, %s23, 1
        %s587 = smul.addr %s586, 2
        %s588 = scalar_lea.vmem %s5, %s587
      $region64: #{conv_model_forward.10} parent=55 // pred_fallthru
        _
    $region56: #{conv_model_forward.10} parent=5 // pred_fallthru
      _
  $region6: #{conv_model_forward.10} parent=0 // loop_footer
    %s16 = sadd.s32 1, %s12
  $region7: #{conv_model_forward.10} parent=0 // loop_footer_branch
    %11 = sbr.rel target = $region3
  $region8: #{conv_model_forward.10} parent=0 // loop_exit
    _

// kernel: conv_model_forward.12
$region0: #{conv_model_forward.12}
  #allocation0 [shape = 'u32[]', space=smem, size = 0x4, offset = 0x4, fixed_abs, tag = 'smem constant byte address 0x4 - core index']
  #allocation1 [shape = 'u32[72,128]{1,0:T(1,128)}', space=vmem, size = 0x9000, scoped, tag = 'internal scratch']
  #allocation2 [shape = 'f32[1,128]{1,0:T(1,128)}', space=vmem, size = 0x200, scoped, tag = 'scratch operand']
  %s0 = inlined_call_operand.vmem [shape: f32[2,128,128], index: 0, kind: input, shape index: {}]
  %s1 = inlined_call_operand.vmem [shape: f32[2,128], index: 1, kind: input, shape index: {}]
  %s2 = inlined_call_operand.vmem [shape: bf16[2,128,128], index: 2, kind: input, shape index: {}]
  %s3 = inlined_call_operand.vmem [shape: f32[1,128], index: 3, kind: input, shape index: {}]
  %s4 = inlined_call_operand.vmem [shape: f32[2,128,128], index: 4, kind: input, shape index: {}]
  %s5 = inlined_call_operand.vmem [shape: f32[2,128,128], index: 5, kind: output, shape index: {0}]
  %s6 = inlined_call_operand.vmem [shape: f32[2,2,128], index: 6, kind: output, shape index: {1}]
  %7 = xla_tuple %s5, %s6
  %s8 = sld [smem:[#allocation0]]
  $region69: #{conv_model_forward.12} parent=0
    _
  %s10 = ssub.s32 1, %s8
  %s11 = scalar_select 0, %s10, %s8
  loop: start=0, step=1, limit=10
  $region2: #{conv_model_forward.12} parent=0 // loop_pre_header
    _
  $region3: #{conv_model_forward.12} parent=0 // loop_header
    %s13 = sphi 0, %s17
    %p14 = scmp.ge.s32.totalorder %s13, 10
    %s20 = sphi 0, %s32
    %s21 = sphi 0, %s28
    %s22 = sphi 0, %s20
    %s23 = sphi 0, %s21
    %s24 = sphi 0, %s22
    %s25 = sphi 0, %s23
    %s37 = sphi 0, %s39
    %s40 = sphi 0, %s37
    %s41 = sphi 0, %s40
    %s57 = sphi 0, %s41
    %s61 = sphi 0, %s61
    %s63 = sphi 0, %s61
    %s64 = sphi 0, %s63
    %s78 = sphi 0, %s64
    %s82 = sphi 0, %s82
    %s84 = sphi 0, %s82
    %s85 = sphi 0, %s84
    %s99 = sphi 0, %s85
    %s103 = sphi 0, %s103
    %s105 = sphi 0, %s103
    %s106 = sphi 0, %s105
    %s120 = sphi 0, %s106
    %s128 = sphi 0, %s130
    %s131 = sphi 0, %s128
    %s132 = sphi 0, %s131
    %s148 = sphi 0, %s132
    %s156 = sphi 0, %s158
    %s159 = sphi 0, %s156
    %s160 = sphi 0, %s159
    %s176 = sphi 0, %s160
    %s182 = sphi 0, %s184
    %s185 = sphi 0, %s182
    %s186 = sphi 0, %s185
    %s202 = sphi 0, %s186
  $region4: #{conv_model_forward.12} parent=0 // loop_header_branch
    %16 = sbr.rel (%p14) target = $region8
  $region5: #{conv_model_forward.12} parent=0 // loop_body
    %s18 = ssub.s32 %s13, 1
    %s19 = ssub.s32 %s13, 2
    %s26 = sadd.s32 1, %s21
    %p27 = scmp.ge.s32.totalorder %s26, 4
    %s28 = scalar_select %p27, 0, %s26
    %s29 = sadd.s32 1, %s20
    %s30 = scalar_select %p27, %s29, %s20
    %p31 = scmp.ge.s32.totalorder %s30, 2
    %s32 = scalar_select %p31, 0, %s30
    %s33 = ssub.s32 %s20, %s32
    %s34 = ssub.s32 %s21, %s28
    %s35 = sor.u32 %s33, %s34
    %p36 = scmp.eq.s32.totalorder %s35, 0
    %s38 = sadd.s32 %s37, 1
    %s39 = scalar_select %p36, %s37, %s38
    %p42 = pneg %p36
    %p43 = scmp.eq.s32.totalorder %s13, 7
    %p44 = por %p42, %p43
    %p45 = scmp.ne.s32.totalorder %s37, %s40
    %p46 = scmp.eq.s32.totalorder %s13, 0
    %p47 = por %p45, %p46
    %p48 = scmp.ne.s32.totalorder %s37, %s40
    %p49 = scmp.eq.s32.totalorder %s18, 7
    %p50 = por %p48, %p49
    %p51 = scmp.ne.s32.totalorder %s40, %s41
    %p52 = scmp.eq.s32.totalorder %s18, 0
    %p53 = por %p51, %p52
    %p54 = scmp.ne.s32.totalorder %s40, %s41
    %p55 = scmp.eq.s32.totalorder %s19, 7
    %p56 = por %p54, %p55
    %p58 = scmp.ne.s32.totalorder %s41, %s57
    %p59 = scmp.eq.s32.totalorder %s19, 0
    %p60 = por %p58, %p59
    %s62 = sadd.s32 %s61, 1
    %p65 = scmp.eq.s32.totalorder %s13, 7
    %p66 = scmp.ne.s32.totalorder %s61, %s63
    %p67 = scmp.eq.s32.totalorder %s13, 0
    %p68 = por %p66, %p67
    %p69 = scmp.ne.s32.totalorder %s61, %s63
    %p70 = scmp.eq.s32.totalorder %s18, 7
    %p71 = por %p69, %p70
    %p72 = scmp.ne.s32.totalorder %s63, %s64
    %p73 = scmp.eq.s32.totalorder %s18, 0
    %p74 = por %p72, %p73
    %p75 = scmp.ne.s32.totalorder %s63, %s64
    %p76 = scmp.eq.s32.totalorder %s19, 7
    %p77 = por %p75, %p76
    %p79 = scmp.ne.s32.totalorder %s64, %s78
    %p80 = scmp.eq.s32.totalorder %s19, 0
    %p81 = por %p79, %p80
    %s83 = sadd.s32 %s82, 1
    %p86 = scmp.eq.s32.totalorder %s13, 7
    %p87 = scmp.ne.s32.totalorder %s82, %s84
    %p88 = scmp.eq.s32.totalorder %s13, 0
    %p89 = por %p87, %p88
    %p90 = scmp.ne.s32.totalorder %s82, %s84
    %p91 = scmp.eq.s32.totalorder %s18, 7
    %p92 = por %p90, %p91
    %p93 = scmp.ne.s32.totalorder %s84, %s85
    %p94 = scmp.eq.s32.totalorder %s18, 0
    %p95 = por %p93, %p94
    %p96 = scmp.ne.s32.totalorder %s84, %s85
    %p97 = scmp.eq.s32.totalorder %s19, 7
    %p98 = por %p96, %p97
    %p100 = scmp.ne.s32.totalorder %s85, %s99
    %p101 = scmp.eq.s32.totalorder %s19, 0
    %p102 = por %p100, %p101
    %s104 = sadd.s32 %s103, 1
    %p107 = scmp.eq.s32.totalorder %s13, 7
    %p108 = scmp.ne.s32.totalorder %s103, %s105
    %p109 = scmp.eq.s32.totalorder %s13, 0
    %p110 = por %p108, %p109
    %p111 = scmp.ne.s32.totalorder %s103, %s105
    %p112 = scmp.eq.s32.totalorder %s18, 7
    %p113 = por %p111, %p112
    %p114 = scmp.ne.s32.totalorder %s105, %s106
    %p115 = scmp.eq.s32.totalorder %s18, 0
    %p116 = por %p114, %p115
    %p117 = scmp.ne.s32.totalorder %s105, %s106
    %p118 = scmp.eq.s32.totalorder %s19, 7
    %p119 = por %p117, %p118
    %p121 = scmp.ne.s32.totalorder %s106, %s120
    %p122 = scmp.eq.s32.totalorder %s19, 0
    %p123 = por %p121, %p122
    %s124 = ssub.s32 %s20, %s32
    %s125 = ssub.s32 %s21, %s28
    %s126 = sor.u32 %s124, %s125
    %p127 = scmp.eq.s32.totalorder %s126, 0
    %s129 = sadd.s32 %s128, 1
    %s130 = scalar_select %p127, %s128, %s129
    %p133 = pneg %p127
    %p134 = scmp.eq.s32.totalorder %s13, 7
    %p135 = por %p133, %p134
    %p136 = scmp.ne.s32.totalorder %s128, %s131
    %p137 = scmp.eq.s32.totalorder %s13, 0
    %p138 = por %p136, %p137
    %p139 = scmp.ne.s32.totalorder %s128, %s131
    %p140 = scmp.eq.s32.totalorder %s18, 7
    %p141 = por %p139, %p140
    %p142 = scmp.ne.s32.totalorder %s131, %s132
    %p143 = scmp.eq.s32.totalorder %s18, 0
    %p144 = por %p142, %p143
    %p145 = scmp.ne.s32.totalorder %s131, %s132
    %p146 = scmp.eq.s32.totalorder %s19, 7
    %p147 = por %p145, %p146
    %p149 = scmp.ne.s32.totalorder %s132, %s148
    %p150 = scmp.eq.s32.totalorder %s19, 0
    %p151 = por %p149, %p150
    %s152 = ssub.s32 %s20, %s32
    %s153 = ssub.s32 %s21, %s28
    %s154 = sor.u32 %s152, %s153
    %p155 = scmp.eq.s32.totalorder %s154, 0
    %s157 = sadd.s32 %s156, 1
    %s158 = scalar_select %p155, %s156, %s157
    %p161 = pneg %p155
    %p162 = scmp.eq.s32.totalorder %s13, 7
    %p163 = por %p161, %p162
    %p164 = scmp.ne.s32.totalorder %s156, %s159
    %p165 = scmp.eq.s32.totalorder %s13, 0
    %p166 = por %p164, %p165
    %p167 = scmp.ne.s32.totalorder %s156, %s159
    %p168 = scmp.eq.s32.totalorder %s18, 7
    %p169 = por %p167, %p168
    %p170 = scmp.ne.s32.totalorder %s159, %s160
    %p171 = scmp.eq.s32.totalorder %s18, 0
    %p172 = por %p170, %p171
    %p173 = scmp.ne.s32.totalorder %s159, %s160
    %p174 = scmp.eq.s32.totalorder %s19, 7
    %p175 = por %p173, %p174
    %p177 = scmp.ne.s32.totalorder %s160, %s176
    %p178 = scmp.eq.s32.totalorder %s19, 0
    %p179 = por %p177, %p178
    %s180 = ssub.s32 %s20, %s32
    %p181 = scmp.eq.s32.totalorder %s180, 0
    %s183 = sadd.s32 %s182, 1
    %s184 = scalar_select %p181, %s182, %s183
    %p187 = pneg %p181
    %p188 = scmp.eq.s32.totalorder %s13, 7
    %p189 = por %p187, %p188
    %p190 = scmp.ne.s32.totalorder %s182, %s185
    %p191 = scmp.eq.s32.totalorder %s13, 0
    %p192 = por %p190, %p191
    %p193 = scmp.ne.s32.totalorder %s182, %s185
    %p194 = scmp.eq.s32.totalorder %s18, 7
    %p195 = por %p193, %p194
    %p196 = scmp.ne.s32.totalorder %s185, %s186
    %p197 = scmp.eq.s32.totalorder %s18, 0
    %p198 = por %p196, %p197
    %p199 = scmp.ne.s32.totalorder %s185, %s186
    %p200 = scmp.eq.s32.totalorder %s19, 7
    %p201 = por %p199, %p200
    %p203 = scmp.ne.s32.totalorder %s186, %s202
    %p204 = scmp.eq.s32.totalorder %s19, 0
    %p205 = por %p203, %p204
    %p206 = scmp.le.s32.totalorder 1, %s13
    %p207 = scmp.lt.s32.totalorder %s13, 9
    %p208 = pnand %p206, %p207
    %p209 = pneg %p208
    // Predicated region
    $region9: #{conv_model_forward.12} parent=5 // pred_check
      _
    $region10: #{conv_model_forward.12} parent=5 // pred_check_branch
      %211 = sbr.rel (%p208) target = $region12
    $region11: #{conv_model_forward.12} parent=5 // pred_region
      %s212 = ssub.s32 %s13, 1
      // Predicated region
      $region13: #{conv_model_forward.12} parent=11 // pred_check
        %p213 = pneg %p74
      $region14: #{conv_model_forward.12} parent=11 // pred_check_branch
        %215 = sbr.rel (%p213) target = $region16
      $region15: #{conv_model_forward.12} parent=11 // pred_region
        _
      $region16: #{conv_model_forward.12} parent=11 // pred_fallthru
        _
      // Predicated region
      $region17: #{conv_model_forward.12} parent=11 // pred_check
        %p216 = pneg %p95
      $region18: #{conv_model_forward.12} parent=11 // pred_check_branch
        %218 = sbr.rel (%p216) target = $region20
      $region19: #{conv_model_forward.12} parent=11 // pred_region
        _
      $region20: #{conv_model_forward.12} parent=11 // pred_fallthru
        _
      // Predicated region
      $region21: #{conv_model_forward.12} parent=11 // pred_check
        %p219 = pneg %p116
      $region22: #{conv_model_forward.12} parent=11 // pred_check_branch
        %221 = sbr.rel (%p219) target = $region24
      $region23: #{conv_model_forward.12} parent=11 // pred_region
        _
      $region24: #{conv_model_forward.12} parent=11 // pred_fallthru
        _
    $region12: #{conv_model_forward.12} parent=5 // pred_fallthru
      _
    %p222 = scmp.lt.s32.totalorder %s13, 8
    // Predicated region
    $region25: #{conv_model_forward.12} parent=5 // pred_check
      %p223 = pneg %p222
    $region26: #{conv_model_forward.12} parent=5 // pred_check_branch
      %225 = sbr.rel (%p223) target = $region28
    $region27: #{conv_model_forward.12} parent=5 // pred_region
      // Predicated region
      $region29: #{conv_model_forward.12} parent=27 // pred_check
        %p226 = pneg %p47
      $region30: #{conv_model_forward.12} parent=27 // pred_check_branch
        %228 = sbr.rel (%p226) target = $region32
      $region31: #{conv_model_forward.12} parent=27 // pred_region
        %s229 = smul.u32 4, %s21
        %p230 = scmp.lt.s32.totalorder %s20, 1
        %s231 = scalar_select %p230, %s20, 1
        %p232 = scmp.lt.s32.totalorder %s229, 15
        %s233 = scalar_select %p232, %s229, 15
        %s234 = smul.addr %s231, 16
        %s235 = sadd.s32 %s233, %s234
        %s236 = smul.addr %s235, 8
        %s237 = scalar_lea.vmem %s0, %s236
        %s238 = smul.u32 4, %s21
      $region32: #{conv_model_forward.12} parent=27 // pred_fallthru
        _
      // Predicated region
      $region33: #{conv_model_forward.12} parent=27 // pred_check
        %p239 = pneg %p138
      $region34: #{conv_model_forward.12} parent=27 // pred_check_branch
        %241 = sbr.rel (%p239) target = $region36
      $region35: #{conv_model_forward.12} parent=27 // pred_region
        %s242 = smul.u32 4, %s21
        %p243 = scmp.lt.s32.totalorder %s20, 1
        %s244 = scalar_select %p243, %s20, 1
        %p245 = scmp.lt.s32.totalorder %s242, 15
        %s246 = scalar_select %p245, %s242, 15
        %s247 = smul.addr %s244, 16
        %s248 = sadd.s32 %s246, %s247
        %s249 = smul.addr %s248, 8
        %s250 = scalar_lea.vmem %s4, %s249
        %s251 = smul.u32 4, %s21
      $region36: #{conv_model_forward.12} parent=27 // pred_fallthru
        _
    $region28: #{conv_model_forward.12} parent=5 // pred_fallthru
      _
    %p252 = scmp.le.s32.totalorder 1, %s13
    %p253 = scmp.lt.s32.totalorder %s13, 9
    %p254 = pnand %p252, %p253
    %p255 = pneg %p254
    // Predicated region
    $region37: #{conv_model_forward.12} parent=5 // pred_check
      _
    $region38: #{conv_model_forward.12} parent=5 // pred_check_branch
      %257 = sbr.rel (%p254) target = $region40
    $region39: #{conv_model_forward.12} parent=5 // pred_region
      %s258 = ssub.s32 %s13, 1
      %s259 = smul.u32 4, %s23
      %p260 = scmp.lt.s32.totalorder %s22, 1
      %s261 = scalar_select %p260, %s22, 1
      %p262 = scmp.lt.s32.totalorder %s259, 15
      %s263 = scalar_select %p262, %s259, 15
      %s264 = smul.addr %s261, 16
      %s265 = sadd.s32 %s263, %s264
      %s266 = smul.addr %s265, 8
      %s267 = scalar_lea.vmem %s0, %s266
      %p268 = pneg %p53
      %p269 = pneg %p50
      %p270 = pneg %p74
      %p271 = pneg %p71
      %p272 = pneg %p95
      %p273 = pneg %p92
      %p274 = pneg %p116
      %p275 = pneg %p113
      %s276 = smul.u32 4, %s23
      %p277 = scmp.lt.s32.totalorder %s22, 1
      %s278 = scalar_select %p277, %s22, 1
      %p279 = scmp.lt.s32.totalorder %s276, 15
      %s280 = scalar_select %p279, %s276, 15
      %s281 = smul.addr %s278, 16
      %s282 = sadd.s32 %s280, %s281
      %s283 = smul.addr %s282, 8
      %s284 = scalar_lea.vmem %s4, %s283
      %p285 = pneg %p144
      %p286 = pneg %p141
      %p287 = pneg %p172
      %p288 = pneg %p169
      %s289 = smul.u32 4, %s23
      %p290 = scmp.lt.s32.totalorder %s22, 1
      %s291 = scalar_select %p290, %s22, 1
      %p292 = scmp.lt.s32.totalorder %s289, 15
      %s293 = scalar_select %p292, %s289, 15
      %s294 = smul.addr %s291, 16
      %s295 = sadd.s32 %s293, %s294
      %s296 = smul.addr %s295, 8
      %s297 = scalar_lea.vmem %s5, %s296
      %p298 = pneg %p198
      %p299 = pneg %p195
      %p300 = scmp.lt.s32.totalorder %s22, 1
      %s301 = scalar_select %p300, %s22, 1
      %s302 = smul.addr %s301, 2
      %s303 = scalar_lea.vmem %s6, %s302
      %s304 = smul.u32 4, %s23
      %p305 = scmp.lt.s32.totalorder %s22, 1
      %s306 = scalar_select %p305, %s22, 1
      %p307 = scmp.lt.s32.totalorder %s304, 15
      %s308 = scalar_select %p307, %s304, 15
      %s309 = smul.addr %s306, 16
      %s310 = sadd.s32 %s308, %s309
      %s311 = smul.addr %s310, 8
      %s312 = scalar_lea.vmem %s0, %s311
      %s313 = smul.u32 4, %s23
      %s314 = smul.u32 4, %s23
      %p315 = scmp.lt.s32.totalorder %s22, 1
      %s316 = scalar_select %p315, %s22, 1
      %p317 = scmp.lt.s32.totalorder %s314, 15
      %s318 = scalar_select %p317, %s314, 15
      %s319 = smul.addr %s316, 16
      %s320 = sadd.s32 %s318, %s319
      %s321 = smul.addr %s320, 8
      %s322 = scalar_lea.vmem %s4, %s321
      %s323 = smul.u32 4, %s23
      %s324 = smul.u32 4, %s23
      %p325 = scmp.lt.s32.totalorder %s22, 1
      %s326 = scalar_select %p325, %s22, 1
      %p327 = scmp.lt.s32.totalorder %s324, 15
      %s328 = scalar_select %p327, %s324, 15
      %s329 = smul.addr %s326, 16
      %s330 = sadd.s32 %s328, %s329
      %s331 = smul.addr %s330, 8
      %s332 = scalar_lea.vmem %s5, %s331
      %s333 = smul.u32 4, %s23
      %p334 = scmp.lt.s32.totalorder %s22, 1
      %s335 = scalar_select %p334, %s22, 1
      %s336 = smul.addr %s335, 2
      %s337 = scalar_lea.vmem %s6, %s336
      %p338 = scmp.eq.s32.totalorder %s23, 0
      // Predicated region
      $region41: #{conv_model_forward.12} parent=39 // pred_check
        %p339 = pneg %p338
      $region42: #{conv_model_forward.12} parent=39 // pred_check_branch
        %341 = sbr.rel (%p339) target = $region44
      $region43: #{conv_model_forward.12} parent=39 // pred_region
        %342 = vst [vmem:[#allocation2] sm:$0x1] 0.0
      $region44: #{conv_model_forward.12} parent=39 // pred_fallthru
        _
      %v343 = vld [vmem:[%s312] sm:$0xff]
      %v344 = vld [vmem:[%s312 + $0x8] sm:$0xff]
      %v345 = vld [vmem:[%s312 + $0x10] sm:$0xff]
      %v346 = vld [vmem:[%s312 + $0x18] sm:$0xff]
      %v347 = vld [vmem:[%s1] sm:$0x1]
      %v348 = vld [vmem:[%s1 + $0x1] sm:$0x1]
      %v349 = vperm.slane %v347, 0
      %v350 = vmul.f32 %v343, %v349
      %v351 = vmul.f32 %v344, %v349
      %v352 = vmul.f32 %v345, %v349
      %v353 = vmul.f32 %v346, %v349
      %v354 = vperm.slane %v348, 0
      %v355 = vadd.f32 %v350, %v354
      %v356 = vadd.f32 %v351, %v354
      %v357 = vadd.f32 %v352, %v354
      %v358 = vadd.f32 %v353, %v354
      %v359 = vmax.f32 %v355, 0.0
      %v360 = vmax.f32 %v356, 0.0
      %v361 = vmax.f32 %v357, 0.0
      %v362 = vmax.f32 %v358, 0.0
      %v363 = vlaneseq
      %v364 = vshrl.u32 %v363, 7
      %v365 = vadd.s32 %v364, 8
      %v366 = vadd.s32 %v364, 16
      %v367 = vadd.s32 %v364, 24
      %v368 = vrot.slane %v359, 7
      %v369 = vrot.slane %v360, 7
      %v370 = vrot.slane %v361, 7
      %v371 = vrot.slane %v362, 7
      %vm372 = vcmp.lt.s32.totalorder %v364, 1
      %v373 = vsel %vm372, %v370, %v371
      %v374 = vsel %vm372, %v369, %v370
      %v375 = vsel %vm372, %v368, %v369
      %v376 = vsel %vm372, %v371, %v368
      %v377 = vld [vmem:[#allocation2] sm:$0x1]
      %vm378 = vcmp.eq.s32.totalorder %v364, 0
      %vm379 = vcmp.eq.s32.totalorder %v365, 0
      %vm380 = vcmp.eq.s32.totalorder %v366, 0
      %vm381 = vcmp.eq.s32.totalorder %v367, 0
      %v383 = vperm.slane %v377, 0
      %v385 = vsel %vm378, 1, 0
      %v386 = vsel %vm379, 1, 0
      %v387 = vsel %vm380, 1, 0
      %v388 = vsel %vm381, 1, 0
      %vm389 = vcmp.eq.s32.totalorder %v385, 1
      %vm390 = vcmp.eq.s32.totalorder %v386, 1
      %vm391 = vcmp.eq.s32.totalorder %v387, 1
      %vm392 = vcmp.eq.s32.totalorder %v388, 1
      %v393 = vsel %vm389, %v383, %v376
      %v394 = vsel %vm390, %v383, %v375
      %v395 = vsel %vm391, %v383, %v374
      %v396 = vsel %vm392, %v383, %v373
      %v397 = vpack.c.bf16 %v394, %v393
      %v398 = vpack.c.bf16 %v396, %v395
      %v399 = vld [vmem:[%s2] sm:$0xf]
      %v400 = vld [vmem:[%s2 + $0x4] sm:$0xf]
      %v401 = vld [vmem:[%s2 + $0x8] sm:$0xf]
      %v402 = vld [vmem:[%s2 + $0xc] sm:$0xf]
      %v403 = vld [vmem:[%s2 + $0x10] sm:$0xf]
      %v404 = vld [vmem:[%s2 + $0x14] sm:$0xf]
      %v405 = vld [vmem:[%s2 + $0x18] sm:$0xf]
      %v406 = vld [vmem:[%s2 + $0x1c] sm:$0xf]
      %v407 = vld [vmem:[%s2 + $0x20] sm:$0xf]
      %v408 = vld [vmem:[%s2 + $0x24] sm:$0xf]
      %v409 = vld [vmem:[%s2 + $0x28] sm:$0xf]
      %v410 = vld [vmem:[%s2 + $0x2c] sm:$0xf]
      %v411 = vld [vmem:[%s2 + $0x30] sm:$0xf]
      %v412 = vld [vmem:[%s2 + $0x34] sm:$0xf]
      %v413 = vld [vmem:[%s2 + $0x38] sm:$0xf]
      %v414 = vld [vmem:[%s2 + $0x3c] sm:$0xf]
      %v415 = vpack.c.bf16 %v360, %v359
      %v416 = vpack.c.bf16 %v362, %v361
      %s417 = scalar_lea.vmem %s2, 64
      %v418 = vld [vmem:[%s417] sm:$0xf]
      %v419 = vld [vmem:[%s417 + $0x4] sm:$0xf]
      %v420 = vld [vmem:[%s417 + $0x8] sm:$0xf]
      %v421 = vld [vmem:[%s417 + $0xc] sm:$0xf]
      %v422 = vld [vmem:[%s417 + $0x10] sm:$0xf]
      %v423 = vld [vmem:[%s417 + $0x14] sm:$0xf]
      %v424 = vld [vmem:[%s417 + $0x18] sm:$0xf]
      %v425 = vld [vmem:[%s417 + $0x1c] sm:$0xf]
      %v426 = vld [vmem:[%s417 + $0x20] sm:$0xf]
      %v427 = vld [vmem:[%s417 + $0x24] sm:$0xf]
      %v428 = vld [vmem:[%s417 + $0x28] sm:$0xf]
      %v429 = vld [vmem:[%s417 + $0x2c] sm:$0xf]
      %v430 = vld [vmem:[%s417 + $0x30] sm:$0xf]
      %v431 = vld [vmem:[%s417 + $0x34] sm:$0xf]
      %v432 = vld [vmem:[%s417 + $0x38] sm:$0xf]
      %v433 = vld [vmem:[%s417 + $0x3c] sm:$0xf]
      %v450 = vunpack.c.l.b16 %v418
      %v451 = vunpack.c.l.b16 %v419
      %v452 = vunpack.c.l.b16 %v420
      %v453 = vunpack.c.l.b16 %v421
      %v454 = vunpack.c.l.b16 %v422
      %v455 = vunpack.c.l.b16 %v423
      %v456 = vunpack.c.l.b16 %v424
      %v457 = vunpack.c.l.b16 %v425
      %v458 = vunpack.c.l.b16 %v426
      %v459 = vunpack.c.l.b16 %v427
      %v460 = vunpack.c.l.b16 %v428
      %v461 = vunpack.c.l.b16 %v429
      %v462 = vunpack.c.l.b16 %v430
      %v463 = vunpack.c.l.b16 %v431
      %v464 = vunpack.c.l.b16 %v432
      %v465 = vunpack.c.l.b16 %v433
      %v466 = vpack.c.b16 %v451, %v450
      %v467 = vpack.c.b16 %v453, %v452
      %v468 = vpack.c.b16 %v455, %v454
      %v469 = vpack.c.b16 %v457, %v456
      %v470 = vpack.c.b16 %v459, %v458
      %v471 = vpack.c.b16 %v461, %v460
      %v472 = vpack.c.b16 %v463, %v462
      %v473 = vpack.c.b16 %v465, %v464
      %482 = vmatpush.bf16.msra.mxu0 %v473
      %483 = vmatpush.bf16.msra.mxu0 %v472
      %484 = vmatpush.bf16.msra.mxu0 %v471
      %485 = vmatpush.bf16.msra.mxu0 %v470
      %486 = vmatpush.bf16.msra.mxu0 %v469
      %487 = vmatpush.bf16.msra.mxu0 %v468
      %488 = vmatpush.bf16.msra.mxu0 %v467
      %489 = vmatpush.bf16.msra.mxu0 %v466
      %490 = vmatmul.bf16.gmra.mxu0 %v415
      %v491 = vpop.f32.mrf.mxu0
      %v492 = vadd.f32 0.0, %v491
      %v493 = vpop.f32.mrf.mxu0
      %v494 = vadd.f32 0.0, %v493
      %495 = vmatmul.bf16.gmra.mxu0 %v416
      %v496 = vpop.f32.mrf.mxu0
      %v497 = vadd.f32 0.0, %v496
      %v498 = vpop.f32.mrf.mxu0
      %v499 = vadd.f32 0.0, %v498
      %500 = vdwg.mxu0
      %v517 = vunpack.c.l.b16 %v399
      %v518 = vunpack.c.l.b16 %v400
      %v519 = vunpack.c.l.b16 %v401
      %v520 = vunpack.c.l.b16 %v402
      %v521 = vunpack.c.l.b16 %v403
      %v522 = vunpack.c.l.b16 %v404
      %v523 = vunpack.c.l.b16 %v405
      %v524 = vunpack.c.l.b16 %v406
      %v525 = vunpack.c.l.b16 %v407
      %v526 = vunpack.c.l.b16 %v408
      %v527 = vunpack.c.l.b16 %v409
      %v528 = vunpack.c.l.b16 %v410
      %v529 = vunpack.c.l.b16 %v411
      %v530 = vunpack.c.l.b16 %v412
      %v531 = vunpack.c.l.b16 %v413
      %v532 = vunpack.c.l.b16 %v414
      %v533 = vpack.c.b16 %v518, %v517
      %v534 = vpack.c.b16 %v520, %v519
      %v535 = vpack.c.b16 %v522, %v521
      %v536 = vpack.c.b16 %v524, %v523
      %v537 = vpack.c.b16 %v526, %v525
      %v538 = vpack.c.b16 %v528, %v527
      %v539 = vpack.c.b16 %v530, %v529
      %v540 = vpack.c.b16 %v532, %v531
      %549 = vmatpush.bf16.msra.mxu0 %v540
      %550 = vmatpush.bf16.msra.mxu0 %v539
      %551 = vmatpush.bf16.msra.mxu0 %v538
      %552 = vmatpush.bf16.msra.mxu0 %v537
      %553 = vmatpush.bf16.msra.mxu0 %v536
      %554 = vmatpush.bf16.msra.mxu0 %v535
      %555 = vmatpush.bf16.msra.mxu0 %v534
      %556 = vmatpush.bf16.msra.mxu0 %v533
      %557 = vmatmul.bf16.gmra.mxu0 %v397
      %v558 = vpop.f32.mrf.mxu0
      %v559 = vadd.f32 %v492, %v558
      %v560 = vpop.f32.mrf.mxu0
      %v561 = vadd.f32 %v494, %v560
      %562 = vmatmul.bf16.gmra.mxu0 %v398
      %v563 = vpop.f32.mrf.mxu0
      %v564 = vadd.f32 %v497, %v563
      %v565 = vpop.f32.mrf.mxu0
      %v566 = vadd.f32 %v499, %v565
      %567 = vdwg.mxu0
      %v568 = vld [vmem:[%s3] sm:$0x1]
      %v570 = vperm.slane %v568, 0
      %v572 = vadd.f32 %v559, %v570
      %v573 = vadd.f32 %v561, %v570
      %v574 = vadd.f32 %v564, %v570
      %v575 = vadd.f32 %v566, %v570
      %v576 = vld [vmem:[%s322] sm:$0xff]
      %v577 = vld [vmem:[%s322 + $0x8] sm:$0xff]
      %v578 = vld [vmem:[%s322 + $0x10] sm:$0xff]
      %v579 = vld [vmem:[%s322 + $0x18] sm:$0xff]
      %v580 = vadd.f32 %v572, %v576
      %v581 = vadd.f32 %v573, %v577
      %v582 = vadd.f32 %v574, %v578
      %v583 = vadd.f32 %v575, %v579
      %584 = vst [vmem:[%s332] sm:$0xff] %v580
      %585 = vst [vmem:[%s332 + $0x8] sm:$0xff] %v581
      %586 = vst [vmem:[%s332 + $0x10] sm:$0xff] %v582
      %587 = vst [vmem:[%s332 + $0x18] sm:$0xff] %v583
      // Predicated region
      $region45: #{conv_model_forward.12} parent=39 // pred_check
        %p588 = pneg %p338
      $region46: #{conv_model_forward.12} parent=39 // pred_check_branch
        %590 = sbr.rel (%p588) target = $region48
      $region47: #{conv_model_forward.12} parent=39 // pred_region
        %591 = vst [vmem:[%s337] sm:$0x3] 0.0
      $region48: #{conv_model_forward.12} parent=39 // pred_fallthru
        _
      %v592 = vadd.f32 %v580, %v581
      %v593 = vadd.f32 %v592, %v582
      %v594 = vadd.f32 %v593, %v583
      %v595 = vrot.slane %v594, 4
      %v596 = vadd.f32 %v594, %v595
      %v597 = vrot.slane %v596, 2
      %v598 = vadd.f32 %v596, %v597
      %v599 = vrot.slane %v598, 1
      %v600 = vadd.f32 %v598, %v599
      %v601 = vmul.f32 %v580, %v580
      %v602 = vmul.f32 %v581, %v581
      %v603 = vmul.f32 %v582, %v582
      %v604 = vmul.f32 %v583, %v583
      %v605 = vadd.f32 %v601, %v602
      %v606 = vadd.f32 %v605, %v603
      %v607 = vadd.f32 %v606, %v604
      %v608 = vrot.slane %v607, 4
      %v609 = vadd.f32 %v607, %v608
      %v610 = vrot.slane %v609, 2
      %v611 = vadd.f32 %v609, %v610
      %v612 = vrot.slane %v611, 1
      %v613 = vadd.f32 %v611, %v612
      %v614 = vld [vmem:[%s337] sm:$0x3]
      %vm615 = vcmask 1040384
      %v616 = vsel %vm615, %v600, %v613
      %v617 = vadd.f32 %v614, %v616
      %618 = vst [vmem:[%s337] sm:$0x3] %v617
      %619 = vst [vmem:[#allocation2 - $0x7] sm:$0x80] %v362
      %s620 = smul.u32 4, %s23
      %p621 = scmp.lt.s32.totalorder %s22, 1
      %s622 = scalar_select %p621, %s22, 1
      %p623 = scmp.lt.s32.totalorder %s620, 15
      %s624 = scalar_select %p623, %s620, 15
      %s625 = smul.addr %s622, 16
      %s626 = sadd.s32 %s624, %s625
      %s627 = smul.addr %s626, 8
      %s628 = scalar_lea.vmem %s5, %s627
      %p629 = scmp.lt.s32.totalorder %s22, 1
      %s630 = scalar_select %p629, %s22, 1
      %s631 = smul.addr %s630, 2
      %s632 = scalar_lea.vmem %s6, %s631
      // Predicated region
      $region49: #{conv_model_forward.12} parent=39 // pred_check
        %p633 = pneg %p169
      $region50: #{conv_model_forward.12} parent=39 // pred_check_branch
        %635 = sbr.rel (%p633) target = $region52
      $region51: #{conv_model_forward.12} parent=39 // pred_region
        %s636 = smul.u32 4, %s23
      $region52: #{conv_model_forward.12} parent=39 // pred_fallthru
        _
      // Predicated region
      $region53: #{conv_model_forward.12} parent=39 // pred_check
        %p637 = pneg %p195
      $region54: #{conv_model_forward.12} parent=39 // pred_check_branch
        %639 = sbr.rel (%p637) target = $region56
      $region55: #{conv_model_forward.12} parent=39 // pred_region
        _
      $region56: #{conv_model_forward.12} parent=39 // pred_fallthru
        _
    $region40: #{conv_model_forward.12} parent=5 // pred_fallthru
      _
    %p640 = scmp.le.s32.totalorder 2, %s13
    // Predicated region
    $region57: #{conv_model_forward.12} parent=5 // pred_check
      %p641 = pneg %p640
    $region58: #{conv_model_forward.12} parent=5 // pred_check_branch
      %643 = sbr.rel (%p641) target = $region60
    $region59: #{conv_model_forward.12} parent=5 // pred_region
      %s644 = ssub.s32 %s13, 2
      // Predicated region
      $region61: #{conv_model_forward.12} parent=59 // pred_check
        %p645 = pneg %p175
      $region62: #{conv_model_forward.12} parent=59 // pred_check_branch
        %647 = sbr.rel (%p645) target = $region64
      $region63: #{conv_model_forward.12} parent=59 // pred_region
        %s648 = smul.u32 4, %s25
        %p649 = scmp.lt.s32.totalorder %s24, 1
        %s650 = scalar_select %p649, %s24, 1
        %p651 = scmp.lt.s32.totalorder %s648, 15
        %s652 = scalar_select %p651, %s648, 15
        %s653 = smul.addr %s650, 16
        %s654 = sadd.s32 %s652, %s653
        %s655 = smul.addr %s654, 8
        %s656 = scalar_lea.vmem %s5, %s655
      $region64: #{conv_model_forward.12} parent=59 // pred_fallthru
        _
      // Predicated region
      $region65: #{conv_model_forward.12} parent=59 // pred_check
        %p657 = pneg %p201
      $region66: #{conv_model_forward.12} parent=59 // pred_check_branch
        %659 = sbr.rel (%p657) target = $region68
      $region67: #{conv_model_forward.12} parent=59 // pred_region
        %p660 = scmp.lt.s32.totalorder %s24, 1
        %s661 = scalar_select %p660, %s24, 1
        %s662 = smul.addr %s661, 2
        %s663 = scalar_lea.vmem %s6, %s662
      $region68: #{conv_model_forward.12} parent=59 // pred_fallthru
        _
    $region60: #{conv_model_forward.12} parent=5 // pred_fallthru
      _
  $region6: #{conv_model_forward.12} parent=0 // loop_footer
    %s17 = sadd.s32 1, %s13
  $region7: #{conv_model_forward.12} parent=0 // loop_footer_branch
    %12 = sbr.rel target = $region3
  $region8: #{conv_model_forward.12} parent=0 // loop_exit
    _

// kernel: conv_model_forward.11
$region0: #{conv_model_forward.11}
  #allocation0 [shape = 'u32[]', space=smem, size = 0x4, offset = 0x4, fixed_abs, tag = 'smem constant byte address 0x4 - core index']
  #allocation1 [shape = 'u32[72,128]{1,0:T(1,128)}', space=vmem, size = 0x9000, scoped, tag = 'internal scratch']
  #allocation2 [shape = 'f32[1,128]{1,0:T(1,128)}', space=vmem, size = 0x200, scoped, tag = 'scratch operand']
  %s0 = inlined_call_operand.vmem [shape: f32[2,128,128], index: 0, kind: input, shape index: {}]
  %s1 = inlined_call_operand.vmem [shape: f32[2,128], index: 1, kind: input, shape index: {}]
  %s2 = inlined_call_operand.vmem [shape: bf16[2,128,128], index: 2, kind: input, shape index: {}]
  %s3 = inlined_call_operand.vmem [shape: f32[1,128], index: 3, kind: input, shape index: {}]
  %s4 = inlined_call_operand.vmem [shape: f32[2,128,128], index: 4, kind: output, shape index: {0}]
  %s5 = inlined_call_operand.vmem [shape: f32[2,2,128], index: 5, kind: output, shape index: {1}]
  %6 = xla_tuple %s4, %s5
  %s7 = sld [smem:[#allocation0]]
  $region65: #{conv_model_forward.11} parent=0
    _
  %s9 = ssub.s32 1, %s7
  %s10 = scalar_select 0, %s9, %s7
  loop: start=0, step=1, limit=10
  $region2: #{conv_model_forward.11} parent=0 // loop_pre_header
    _
  $region3: #{conv_model_forward.11} parent=0 // loop_header
    %s12 = sphi 0, %s16
    %p13 = scmp.ge.s32.totalorder %s12, 10
    %s19 = sphi 0, %s31
    %s20 = sphi 0, %s27
    %s21 = sphi 0, %s19
    %s22 = sphi 0, %s20
    %s23 = sphi 0, %s21
    %s24 = sphi 0, %s22
    %s36 = sphi 0, %s38
    %s39 = sphi 0, %s36
    %s40 = sphi 0, %s39
    %s56 = sphi 0, %s40
    %s60 = sphi 0, %s60
    %s62 = sphi 0, %s60
    %s63 = sphi 0, %s62
    %s77 = sphi 0, %s63
    %s81 = sphi 0, %s81
    %s83 = sphi 0, %s81
    %s84 = sphi 0, %s83
    %s98 = sphi 0, %s84
    %s102 = sphi 0, %s102
    %s104 = sphi 0, %s102
    %s105 = sphi 0, %s104
    %s119 = sphi 0, %s105
    %s127 = sphi 0, %s129
    %s130 = sphi 0, %s127
    %s131 = sphi 0, %s130
    %s147 = sphi 0, %s131
    %s153 = sphi 0, %s155
    %s156 = sphi 0, %s153
    %s157 = sphi 0, %s156
    %s173 = sphi 0, %s157
  $region4: #{conv_model_forward.11} parent=0 // loop_header_branch
    %15 = sbr.rel (%p13) target = $region8
  $region5: #{conv_model_forward.11} parent=0 // loop_body
    %s17 = ssub.s32 %s12, 1
    %s18 = ssub.s32 %s12, 2
    %s25 = sadd.s32 1, %s20
    %p26 = scmp.ge.s32.totalorder %s25, 4
    %s27 = scalar_select %p26, 0, %s25
    %s28 = sadd.s32 1, %s19
    %s29 = scalar_select %p26, %s28, %s19
    %p30 = scmp.ge.s32.totalorder %s29, 2
    %s31 = scalar_select %p30, 0, %s29
    %s32 = ssub.s32 %s19, %s31
    %s33 = ssub.s32 %s20, %s27
    %s34 = sor.u32 %s32, %s33
    %p35 = scmp.eq.s32.totalorder %s34, 0
    %s37 = sadd.s32 %s36, 1
    %s38 = scalar_select %p35, %s36, %s37
    %p41 = pneg %p35
    %p42 = scmp.eq.s32.totalorder %s12, 7
    %p43 = por %p41, %p42
    %p44 = scmp.ne.s32.totalorder %s36, %s39
    %p45 = scmp.eq.s32.totalorder %s12, 0
    %p46 = por %p44, %p45
    %p47 = scmp.ne.s32.totalorder %s36, %s39
    %p48 = scmp.eq.s32.totalorder %s17, 7
    %p49 = por %p47, %p48
    %p50 = scmp.ne.s32.totalorder %s39, %s40
    %p51 = scmp.eq.s32.totalorder %s17, 0
    %p52 = por %p50, %p51
    %p53 = scmp.ne.s32.totalorder %s39, %s40
    %p54 = scmp.eq.s32.totalorder %s18, 7
    %p55 = por %p53, %p54
    %p57 = scmp.ne.s32.totalorder %s40, %s56
    %p58 = scmp.eq.s32.totalorder %s18, 0
    %p59 = por %p57, %p58
    %s61 = sadd.s32 %s60, 1
    %p64 = scmp.eq.s32.totalorder %s12, 7
    %p65 = scmp.ne.s32.totalorder %s60, %s62
    %p66 = scmp.eq.s32.totalorder %s12, 0
    %p67 = por %p65, %p66
    %p68 = scmp.ne.s32.totalorder %s60, %s62
    %p69 = scmp.eq.s32.totalorder %s17, 7
    %p70 = por %p68, %p69
    %p71 = scmp.ne.s32.totalorder %s62, %s63
    %p72 = scmp.eq.s32.totalorder %s17, 0
    %p73 = por %p71, %p72
    %p74 = scmp.ne.s32.totalorder %s62, %s63
    %p75 = scmp.eq.s32.totalorder %s18, 7
    %p76 = por %p74, %p75
    %p78 = scmp.ne.s32.totalorder %s63, %s77
    %p79 = scmp.eq.s32.totalorder %s18, 0
    %p80 = por %p78, %p79
    %s82 = sadd.s32 %s81, 1
    %p85 = scmp.eq.s32.totalorder %s12, 7
    %p86 = scmp.ne.s32.totalorder %s81, %s83
    %p87 = scmp.eq.s32.totalorder %s12, 0
    %p88 = por %p86, %p87
    %p89 = scmp.ne.s32.totalorder %s81, %s83
    %p90 = scmp.eq.s32.totalorder %s17, 7
    %p91 = por %p89, %p90
    %p92 = scmp.ne.s32.totalorder %s83, %s84
    %p93 = scmp.eq.s32.totalorder %s17, 0
    %p94 = por %p92, %p93
    %p95 = scmp.ne.s32.totalorder %s83, %s84
    %p96 = scmp.eq.s32.totalorder %s18, 7
    %p97 = por %p95, %p96
    %p99 = scmp.ne.s32.totalorder %s84, %s98
    %p100 = scmp.eq.s32.totalorder %s18, 0
    %p101 = por %p99, %p100
    %s103 = sadd.s32 %s102, 1
    %p106 = scmp.eq.s32.totalorder %s12, 7
    %p107 = scmp.ne.s32.totalorder %s102, %s104
    %p108 = scmp.eq.s32.totalorder %s12, 0
    %p109 = por %p107, %p108
    %p110 = scmp.ne.s32.totalorder %s102, %s104
    %p111 = scmp.eq.s32.totalorder %s17, 7
    %p112 = por %p110, %p111
    %p113 = scmp.ne.s32.totalorder %s104, %s105
    %p114 = scmp.eq.s32.totalorder %s17, 0
    %p115 = por %p113, %p114
    %p116 = scmp.ne.s32.totalorder %s104, %s105
    %p117 = scmp.eq.s32.totalorder %s18, 7
    %p118 = por %p116, %p117
    %p120 = scmp.ne.s32.totalorder %s105, %s119
    %p121 = scmp.eq.s32.totalorder %s18, 0
    %p122 = por %p120, %p121
    %s123 = ssub.s32 %s19, %s31
    %s124 = ssub.s32 %s20, %s27
    %s125 = sor.u32 %s123, %s124
    %p126 = scmp.eq.s32.totalorder %s125, 0
    %s128 = sadd.s32 %s127, 1
    %s129 = scalar_select %p126, %s127, %s128
    %p132 = pneg %p126
    %p133 = scmp.eq.s32.totalorder %s12, 7
    %p134 = por %p132, %p133
    %p135 = scmp.ne.s32.totalorder %s127, %s130
    %p136 = scmp.eq.s32.totalorder %s12, 0
    %p137 = por %p135, %p136
    %p138 = scmp.ne.s32.totalorder %s127, %s130
    %p139 = scmp.eq.s32.totalorder %s17, 7
    %p140 = por %p138, %p139
    %p141 = scmp.ne.s32.totalorder %s130, %s131
    %p142 = scmp.eq.s32.totalorder %s17, 0
    %p143 = por %p141, %p142
    %p144 = scmp.ne.s32.totalorder %s130, %s131
    %p145 = scmp.eq.s32.totalorder %s18, 7
    %p146 = por %p144, %p145
    %p148 = scmp.ne.s32.totalorder %s131, %s147
    %p149 = scmp.eq.s32.totalorder %s18, 0
    %p150 = por %p148, %p149
    %s151 = ssub.s32 %s19, %s31
    %p152 = scmp.eq.s32.totalorder %s151, 0
    %s154 = sadd.s32 %s153, 1
    %s155 = scalar_select %p152, %s153, %s154
    %p158 = pneg %p152
    %p159 = scmp.eq.s32.totalorder %s12, 7
    %p160 = por %p158, %p159
    %p161 = scmp.ne.s32.totalorder %s153, %s156
    %p162 = scmp.eq.s32.totalorder %s12, 0
    %p163 = por %p161, %p162
    %p164 = scmp.ne.s32.totalorder %s153, %s156
    %p165 = scmp.eq.s32.totalorder %s17, 7
    %p166 = por %p164, %p165
    %p167 = scmp.ne.s32.totalorder %s156, %s157
    %p168 = scmp.eq.s32.totalorder %s17, 0
    %p169 = por %p167, %p168
    %p170 = scmp.ne.s32.totalorder %s156, %s157
    %p171 = scmp.eq.s32.totalorder %s18, 7
    %p172 = por %p170, %p171
    %p174 = scmp.ne.s32.totalorder %s157, %s173
    %p175 = scmp.eq.s32.totalorder %s18, 0
    %p176 = por %p174, %p175
    %p177 = scmp.le.s32.totalorder 1, %s12
    %p178 = scmp.lt.s32.totalorder %s12, 9
    %p179 = pnand %p177, %p178
    %p180 = pneg %p179
    // Predicated region
    $region9: #{conv_model_forward.11} parent=5 // pred_check
      _
    $region10: #{conv_model_forward.11} parent=5 // pred_check_branch
      %182 = sbr.rel (%p179) target = $region12
    $region11: #{conv_model_forward.11} parent=5 // pred_region
      %s183 = ssub.s32 %s12, 1
      // Predicated region
      $region13: #{conv_model_forward.11} parent=11 // pred_check
        %p184 = pneg %p73
      $region14: #{conv_model_forward.11} parent=11 // pred_check_branch
        %186 = sbr.rel (%p184) target = $region16
      $region15: #{conv_model_forward.11} parent=11 // pred_region
        _
      $region16: #{conv_model_forward.11} parent=11 // pred_fallthru
        _
      // Predicated region
      $region17: #{conv_model_forward.11} parent=11 // pred_check
        %p187 = pneg %p94
      $region18: #{conv_model_forward.11} parent=11 // pred_check_branch
        %189 = sbr.rel (%p187) target = $region20
      $region19: #{conv_model_forward.11} parent=11 // pred_region
        _
      $region20: #{conv_model_forward.11} parent=11 // pred_fallthru
        _
      // Predicated region
      $region21: #{conv_model_forward.11} parent=11 // pred_check
        %p190 = pneg %p115
      $region22: #{conv_model_forward.11} parent=11 // pred_check_branch
        %192 = sbr.rel (%p190) target = $region24
      $region23: #{conv_model_forward.11} parent=11 // pred_region
        _
      $region24: #{conv_model_forward.11} parent=11 // pred_fallthru
        _
    $region12: #{conv_model_forward.11} parent=5 // pred_fallthru
      _
    %p193 = scmp.lt.s32.totalorder %s12, 8
    // Predicated region
    $region25: #{conv_model_forward.11} parent=5 // pred_check
      %p194 = pneg %p193
    $region26: #{conv_model_forward.11} parent=5 // pred_check_branch
      %196 = sbr.rel (%p194) target = $region28
    $region27: #{conv_model_forward.11} parent=5 // pred_region
      // Predicated region
      $region29: #{conv_model_forward.11} parent=27 // pred_check
        %p197 = pneg %p46
      $region30: #{conv_model_forward.11} parent=27 // pred_check_branch
        %199 = sbr.rel (%p197) target = $region32
      $region31: #{conv_model_forward.11} parent=27 // pred_region
        %s200 = smul.u32 4, %s20
        %p201 = scmp.lt.s32.totalorder %s19, 1
        %s202 = scalar_select %p201, %s19, 1
        %p203 = scmp.lt.s32.totalorder %s200, 15
        %s204 = scalar_select %p203, %s200, 15
        %s205 = smul.addr %s202, 16
        %s206 = sadd.s32 %s204, %s205
        %s207 = smul.addr %s206, 8
        %s208 = scalar_lea.vmem %s0, %s207
        %s209 = smul.u32 4, %s20
      $region32: #{conv_model_forward.11} parent=27 // pred_fallthru
        _
    $region28: #{conv_model_forward.11} parent=5 // pred_fallthru
      _
    %p210 = scmp.le.s32.totalorder 1, %s12
    %p211 = scmp.lt.s32.totalorder %s12, 9
    %p212 = pnand %p210, %p211
    %p213 = pneg %p212
    // Predicated region
    $region33: #{conv_model_forward.11} parent=5 // pred_check
      _
    $region34: #{conv_model_forward.11} parent=5 // pred_check_branch
      %215 = sbr.rel (%p212) target = $region36
    $region35: #{conv_model_forward.11} parent=5 // pred_region
      %s216 = ssub.s32 %s12, 1
      %s217 = smul.u32 4, %s22
      %p218 = scmp.lt.s32.totalorder %s21, 1
      %s219 = scalar_select %p218, %s21, 1
      %p220 = scmp.lt.s32.totalorder %s217, 15
      %s221 = scalar_select %p220, %s217, 15
      %s222 = smul.addr %s219, 16
      %s223 = sadd.s32 %s221, %s222
      %s224 = smul.addr %s223, 8
      %s225 = scalar_lea.vmem %s0, %s224
      %p226 = pneg %p52
      %p227 = pneg %p49
      %p228 = pneg %p73
      %p229 = pneg %p70
      %p230 = pneg %p94
      %p231 = pneg %p91
      %p232 = pneg %p115
      %p233 = pneg %p112
      %p234 = pneg %p143
      %p235 = pneg %p140
      %s236 = smul.u32 4, %s22
      %p237 = scmp.lt.s32.totalorder %s21, 1
      %s238 = scalar_select %p237, %s21, 1
      %p239 = scmp.lt.s32.totalorder %s236, 15
      %s240 = scalar_select %p239, %s236, 15
      %s241 = smul.addr %s238, 16
      %s242 = sadd.s32 %s240, %s241
      %s243 = smul.addr %s242, 8
      %s244 = scalar_lea.vmem %s4, %s243
      %p245 = pneg %p169
      %p246 = pneg %p166
      %p247 = scmp.lt.s32.totalorder %s21, 1
      %s248 = scalar_select %p247, %s21, 1
      %s249 = smul.addr %s248, 2
      %s250 = scalar_lea.vmem %s5, %s249
      %s251 = smul.u32 4, %s22
      %p252 = scmp.lt.s32.totalorder %s21, 1
      %s253 = scalar_select %p252, %s21, 1
      %p254 = scmp.lt.s32.totalorder %s251, 15
      %s255 = scalar_select %p254, %s251, 15
      %s256 = smul.addr %s253, 16
      %s257 = sadd.s32 %s255, %s256
      %s258 = smul.addr %s257, 8
      %s259 = scalar_lea.vmem %s0, %s258
      %s260 = smul.u32 4, %s22
      %s261 = smul.u32 4, %s22
      %p262 = scmp.lt.s32.totalorder %s21, 1
      %s263 = scalar_select %p262, %s21, 1
      %p264 = scmp.lt.s32.totalorder %s261, 15
      %s265 = scalar_select %p264, %s261, 15
      %s266 = smul.addr %s263, 16
      %s267 = sadd.s32 %s265, %s266
      %s268 = smul.addr %s267, 8
      %s269 = scalar_lea.vmem %s4, %s268
      %s270 = smul.u32 4, %s22
      %p271 = scmp.lt.s32.totalorder %s21, 1
      %s272 = scalar_select %p271, %s21, 1
      %s273 = smul.addr %s272, 2
      %s274 = scalar_lea.vmem %s5, %s273
      %p275 = scmp.eq.s32.totalorder %s22, 0
      // Predicated region
      $region37: #{conv_model_forward.11} parent=35 // pred_check
        %p276 = pneg %p275
      $region38: #{conv_model_forward.11} parent=35 // pred_check_branch
        %278 = sbr.rel (%p276) target = $region40
      $region39: #{conv_model_forward.11} parent=35 // pred_region
        %279 = vst [vmem:[#allocation2] sm:$0x1] 0.0
      $region40: #{conv_model_forward.11} parent=35 // pred_fallthru
        _
      %v280 = vld [vmem:[%s259] sm:$0xff]
      %v281 = vld [vmem:[%s259 + $0x8] sm:$0xff]
      %v282 = vld [vmem:[%s259 + $0x10] sm:$0xff]
      %v283 = vld [vmem:[%s259 + $0x18] sm:$0xff]
      %v284 = vld [vmem:[%s1] sm:$0x1]
      %v285 = vld [vmem:[%s1 + $0x1] sm:$0x1]
      %v286 = vperm.slane %v284, 0
      %v287 = vmul.f32 %v280, %v286
      %v288 = vmul.f32 %v281, %v286
      %v289 = vmul.f32 %v282, %v286
      %v290 = vmul.f32 %v283, %v286
      %v291 = vperm.slane %v285, 0
      %v292 = vadd.f32 %v287, %v291
      %v293 = vadd.f32 %v288, %v291
      %v294 = vadd.f32 %v289, %v291
      %v295 = vadd.f32 %v290, %v291
      %v296 = vmax.f32 %v292, 0.0
      %v297 = vmax.f32 %v293, 0.0
      %v298 = vmax.f32 %v294, 0.0
      %v299 = vmax.f32 %v295, 0.0
      %v300 = vlaneseq
      %v301 = vshrl.u32 %v300, 7
      %v302 = vadd.s32 %v301, 8
      %v303 = vadd.s32 %v301, 16
      %v304 = vadd.s32 %v301, 24
      %v305 = vrot.slane %v296, 7
      %v306 = vrot.slane %v297, 7
      %v307 = vrot.slane %v298, 7
      %v308 = vrot.slane %v299, 7
      %vm309 = vcmp.lt.s32.totalorder %v301, 1
      %v310 = vsel %vm309, %v307, %v308
      %v311 = vsel %vm309, %v306, %v307
      %v312 = vsel %vm309, %v305, %v306
      %v313 = vsel %vm309, %v308, %v305
      %v314 = vld [vmem:[#allocation2] sm:$0x1]
      %vm315 = vcmp.eq.s32.totalorder %v301, 0
      %vm316 = vcmp.eq.s32.totalorder %v302, 0
      %vm317 = vcmp.eq.s32.totalorder %v303, 0
      %vm318 = vcmp.eq.s32.totalorder %v304, 0
      %v320 = vperm.slane %v314, 0
      %v322 = vsel %vm315, 1, 0
      %v323 = vsel %vm316, 1, 0
      %v324 = vsel %vm317, 1, 0
      %v325 = vsel %vm318, 1, 0
      %vm326 = vcmp.eq.s32.totalorder %v322, 1
      %vm327 = vcmp.eq.s32.totalorder %v323, 1
      %vm328 = vcmp.eq.s32.totalorder %v324, 1
      %vm329 = vcmp.eq.s32.totalorder %v325, 1
      %v330 = vsel %vm326, %v320, %v313
      %v331 = vsel %vm327, %v320, %v312
      %v332 = vsel %vm328, %v320, %v311
      %v333 = vsel %vm329, %v320, %v310
      %v334 = vpack.c.bf16 %v331, %v330
      %v335 = vpack.c.bf16 %v333, %v332
      %v336 = vld [vmem:[%s2] sm:$0xf]
      %v337 = vld [vmem:[%s2 + $0x4] sm:$0xf]
      %v338 = vld [vmem:[%s2 + $0x8] sm:$0xf]
      %v339 = vld [vmem:[%s2 + $0xc] sm:$0xf]
      %v340 = vld [vmem:[%s2 + $0x10] sm:$0xf]
      %v341 = vld [vmem:[%s2 + $0x14] sm:$0xf]
      %v342 = vld [vmem:[%s2 + $0x18] sm:$0xf]
      %v343 = vld [vmem:[%s2 + $0x1c] sm:$0xf]
      %v344 = vld [vmem:[%s2 + $0x20] sm:$0xf]
      %v345 = vld [vmem:[%s2 + $0x24] sm:$0xf]
      %v346 = vld [vmem:[%s2 + $0x28] sm:$0xf]
      %v347 = vld [vmem:[%s2 + $0x2c] sm:$0xf]
      %v348 = vld [vmem:[%s2 + $0x30] sm:$0xf]
      %v349 = vld [vmem:[%s2 + $0x34] sm:$0xf]
      %v350 = vld [vmem:[%s2 + $0x38] sm:$0xf]
      %v351 = vld [vmem:[%s2 + $0x3c] sm:$0xf]
      %v352 = vpack.c.bf16 %v297, %v296
      %v353 = vpack.c.bf16 %v299, %v298
      %s354 = scalar_lea.vmem %s2, 64
      %v355 = vld [vmem:[%s354] sm:$0xf]
      %v356 = vld [vmem:[%s354 + $0x4] sm:$0xf]
      %v357 = vld [vmem:[%s354 + $0x8] sm:$0xf]
      %v358 = vld [vmem:[%s354 + $0xc] sm:$0xf]
      %v359 = vld [vmem:[%s354 + $0x10] sm:$0xf]
      %v360 = vld [vmem:[%s354 + $0x14] sm:$0xf]
      %v361 = vld [vmem:[%s354 + $0x18] sm:$0xf]
      %v362 = vld [vmem:[%s354 + $0x1c] sm:$0xf]
      %v363 = vld [vmem:[%s354 + $0x20] sm:$0xf]
      %v364 = vld [vmem:[%s354 + $0x24] sm:$0xf]
      %v365 = vld [vmem:[%s354 + $0x28] sm:$0xf]
      %v366 = vld [vmem:[%s354 + $0x2c] sm:$0xf]
      %v367 = vld [vmem:[%s354 + $0x30] sm:$0xf]
      %v368 = vld [vmem:[%s354 + $0x34] sm:$0xf]
      %v369 = vld [vmem:[%s354 + $0x38] sm:$0xf]
      %v370 = vld [vmem:[%s354 + $0x3c] sm:$0xf]
      %v387 = vunpack.c.l.b16 %v355
      %v388 = vunpack.c.l.b16 %v356
      %v389 = vunpack.c.l.b16 %v357
      %v390 = vunpack.c.l.b16 %v358
      %v391 = vunpack.c.l.b16 %v359
      %v392 = vunpack.c.l.b16 %v360
      %v393 = vunpack.c.l.b16 %v361
      %v394 = vunpack.c.l.b16 %v362
      %v395 = vunpack.c.l.b16 %v363
      %v396 = vunpack.c.l.b16 %v364
      %v397 = vunpack.c.l.b16 %v365
      %v398 = vunpack.c.l.b16 %v366
      %v399 = vunpack.c.l.b16 %v367
      %v400 = vunpack.c.l.b16 %v368
      %v401 = vunpack.c.l.b16 %v369
      %v402 = vunpack.c.l.b16 %v370
      %v403 = vpack.c.b16 %v388, %v387
      %v404 = vpack.c.b16 %v390, %v389
      %v405 = vpack.c.b16 %v392, %v391
      %v406 = vpack.c.b16 %v394, %v393
      %v407 = vpack.c.b16 %v396, %v395
      %v408 = vpack.c.b16 %v398, %v397
      %v409 = vpack.c.b16 %v400, %v399
      %v410 = vpack.c.b16 %v402, %v401
      %419 = vmatpush.bf16.msra.mxu0 %v410
      %420 = vmatpush.bf16.msra.mxu0 %v409
      %421 = vmatpush.bf16.msra.mxu0 %v408
      %422 = vmatpush.bf16.msra.mxu0 %v407
      %423 = vmatpush.bf16.msra.mxu0 %v406
      %424 = vmatpush.bf16.msra.mxu0 %v405
      %425 = vmatpush.bf16.msra.mxu0 %v404
      %426 = vmatpush.bf16.msra.mxu0 %v403
      %427 = vmatmul.bf16.gmra.mxu0 %v352
      %v428 = vpop.f32.mrf.mxu0
      %v429 = vadd.f32 0.0, %v428
      %v430 = vpop.f32.mrf.mxu0
      %v431 = vadd.f32 0.0, %v430
      %432 = vmatmul.bf16.gmra.mxu0 %v353
      %v433 = vpop.f32.mrf.mxu0
      %v434 = vadd.f32 0.0, %v433
      %v435 = vpop.f32.mrf.mxu0
      %v436 = vadd.f32 0.0, %v435
      %437 = vdwg.mxu0
      %v454 = vunpack.c.l.b16 %v336
      %v455 = vunpack.c.l.b16 %v337
      %v456 = vunpack.c.l.b16 %v338
      %v457 = vunpack.c.l.b16 %v339
      %v458 = vunpack.c.l.b16 %v340
      %v459 = vunpack.c.l.b16 %v341
      %v460 = vunpack.c.l.b16 %v342
      %v461 = vunpack.c.l.b16 %v343
      %v462 = vunpack.c.l.b16 %v344
      %v463 = vunpack.c.l.b16 %v345
      %v464 = vunpack.c.l.b16 %v346
      %v465 = vunpack.c.l.b16 %v347
      %v466 = vunpack.c.l.b16 %v348
      %v467 = vunpack.c.l.b16 %v349
      %v468 = vunpack.c.l.b16 %v350
      %v469 = vunpack.c.l.b16 %v351
      %v470 = vpack.c.b16 %v455, %v454
      %v471 = vpack.c.b16 %v457, %v456
      %v472 = vpack.c.b16 %v459, %v458
      %v473 = vpack.c.b16 %v461, %v460
      %v474 = vpack.c.b16 %v463, %v462
      %v475 = vpack.c.b16 %v465, %v464
      %v476 = vpack.c.b16 %v467, %v466
      %v477 = vpack.c.b16 %v469, %v468
      %486 = vmatpush.bf16.msra.mxu0 %v477
      %487 = vmatpush.bf16.msra.mxu0 %v476
      %488 = vmatpush.bf16.msra.mxu0 %v475
      %489 = vmatpush.bf16.msra.mxu0 %v474
      %490 = vmatpush.bf16.msra.mxu0 %v473
      %491 = vmatpush.bf16.msra.mxu0 %v472
      %492 = vmatpush.bf16.msra.mxu0 %v471
      %493 = vmatpush.bf16.msra.mxu0 %v470
      %494 = vmatmul.bf16.gmra.mxu0 %v334
      %v495 = vpop.f32.mrf.mxu0
      %v496 = vadd.f32 %v429, %v495
      %v497 = vpop.f32.mrf.mxu0
      %v498 = vadd.f32 %v431, %v497
      %499 = vmatmul.bf16.gmra.mxu0 %v335
      %v500 = vpop.f32.mrf.mxu0
      %v501 = vadd.f32 %v434, %v500
      %v502 = vpop.f32.mrf.mxu0
      %v503 = vadd.f32 %v436, %v502
      %504 = vdwg.mxu0
      %v505 = vld [vmem:[%s3] sm:$0x1]
      %v507 = vperm.slane %v505, 0
      %v509 = vadd.f32 %v496, %v507
      %v510 = vadd.f32 %v498, %v507
      %v511 = vadd.f32 %v501, %v507
      %v512 = vadd.f32 %v503, %v507
      %513 = vst [vmem:[%s269] sm:$0xff] %v509
      %514 = vst [vmem:[%s269 + $0x8] sm:$0xff] %v510
      %515 = vst [vmem:[%s269 + $0x10] sm:$0xff] %v511
      %516 = vst [vmem:[%s269 + $0x18] sm:$0xff] %v512
      // Predicated region
      $region41: #{conv_model_forward.11} parent=35 // pred_check
        %p517 = pneg %p275
      $region42: #{conv_model_forward.11} parent=35 // pred_check_branch
        %519 = sbr.rel (%p517) target = $region44
      $region43: #{conv_model_forward.11} parent=35 // pred_region
        %520 = vst [vmem:[%s274] sm:$0x3] 0.0
      $region44: #{conv_model_forward.11} parent=35 // pred_fallthru
        _
      %v521 = vadd.f32 %v509, %v510
      %v522 = vadd.f32 %v521, %v511
      %v523 = vadd.f32 %v522, %v512
      %v524 = vrot.slane %v523, 4
      %v525 = vadd.f32 %v523, %v524
      %v526 = vrot.slane %v525, 2
      %v527 = vadd.f32 %v525, %v526
      %v528 = vrot.slane %v527, 1
      %v529 = vadd.f32 %v527, %v528
      %v530 = vmul.f32 %v509, %v509
      %v531 = vmul.f32 %v510, %v510
      %v532 = vmul.f32 %v511, %v511
      %v533 = vmul.f32 %v512, %v512
      %v534 = vadd.f32 %v530, %v531
      %v535 = vadd.f32 %v534, %v532
      %v536 = vadd.f32 %v535, %v533
      %v537 = vrot.slane %v536, 4
      %v538 = vadd.f32 %v536, %v537
      %v539 = vrot.slane %v538, 2
      %v540 = vadd.f32 %v538, %v539
      %v541 = vrot.slane %v540, 1
      %v542 = vadd.f32 %v540, %v541
      %v543 = vld [vmem:[%s274] sm:$0x3]
      %vm544 = vcmask 1040384
      %v545 = vsel %vm544, %v529, %v542
      %v546 = vadd.f32 %v543, %v545
      %547 = vst [vmem:[%s274] sm:$0x3] %v546
      %548 = vst [vmem:[#allocation2 - $0x7] sm:$0x80] %v299
      %s549 = smul.u32 4, %s22
      %p550 = scmp.lt.s32.totalorder %s21, 1
      %s551 = scalar_select %p550, %s21, 1
      %p552 = scmp.lt.s32.totalorder %s549, 15
      %s553 = scalar_select %p552, %s549, 15
      %s554 = smul.addr %s551, 16
      %s555 = sadd.s32 %s553, %s554
      %s556 = smul.addr %s555, 8
      %s557 = scalar_lea.vmem %s4, %s556
      %p558 = scmp.lt.s32.totalorder %s21, 1
      %s559 = scalar_select %p558, %s21, 1
      %s560 = smul.addr %s559, 2
      %s561 = scalar_lea.vmem %s5, %s560
      // Predicated region
      $region45: #{conv_model_forward.11} parent=35 // pred_check
        %p562 = pneg %p140
      $region46: #{conv_model_forward.11} parent=35 // pred_check_branch
        %564 = sbr.rel (%p562) target = $region48
      $region47: #{conv_model_forward.11} parent=35 // pred_region
        %s565 = smul.u32 4, %s22
      $region48: #{conv_model_forward.11} parent=35 // pred_fallthru
        _
      // Predicated region
      $region49: #{conv_model_forward.11} parent=35 // pred_check
        %p566 = pneg %p166
      $region50: #{conv_model_forward.11} parent=35 // pred_check_branch
        %568 = sbr.rel (%p566) target = $region52
      $region51: #{conv_model_forward.11} parent=35 // pred_region
        _
      $region52: #{conv_model_forward.11} parent=35 // pred_fallthru
        _
    $region36: #{conv_model_forward.11} parent=5 // pred_fallthru
      _
    %p569 = scmp.le.s32.totalorder 2, %s12
    // Predicated region
    $region53: #{conv_model_forward.11} parent=5 // pred_check
      %p570 = pneg %p569
    $region54: #{conv_model_forward.11} parent=5 // pred_check_branch
      %572 = sbr.rel (%p570) target = $region56
    $region55: #{conv_model_forward.11} parent=5 // pred_region
      %s573 = ssub.s32 %s12, 2
      // Predicated region
      $region57: #{conv_model_forward.11} parent=55 // pred_check
        %p574 = pneg %p146
      $region58: #{conv_model_forward.11} parent=55 // pred_check_branch
        %576 = sbr.rel (%p574) target = $region60
      $region59: #{conv_model_forward.11} parent=55 // pred_region
        %s577 = smul.u32 4, %s24
        %p578 = scmp.lt.s32.totalorder %s23, 1
        %s579 = scalar_select %p578, %s23, 1
        %p580 = scmp.lt.s32.totalorder %s577, 15
        %s581 = scalar_select %p580, %s577, 15
        %s582 = smul.addr %s579, 16
        %s583 = sadd.s32 %s581, %s582
        %s584 = smul.addr %s583, 8
        %s585 = scalar_lea.vmem %s4, %s584
      $region60: #{conv_model_forward.11} parent=55 // pred_fallthru
        _
      // Predicated region
      $region61: #{conv_model_forward.11} parent=55 // pred_check
        %p586 = pneg %p172
      $region62: #{conv_model_forward.11} parent=55 // pred_check_branch
        %588 = sbr.rel (%p586) target = $region64
      $region63: #{conv_model_forward.11} parent=55 // pred_region
        %p589 = scmp.lt.s32.totalorder %s23, 1
        %s590 = scalar_select %p589, %s23, 1
        %s591 = smul.addr %s590, 2
        %s592 = scalar_lea.vmem %s5, %s591
      $region64: #{conv_model_forward.11} parent=55 // pred_fallthru
        _
    $region56: #{conv_model_forward.11} parent=5 // pred_fallthru
      _
  $region6: #{conv_model_forward.11} parent=0 // loop_footer
    %s16 = sadd.s32 1, %s12
  $region7: #{conv_model_forward.11} parent=0 // loop_footer_branch
    %11 = sbr.rel target = $region3
  $region8: #{conv_model_forward.11} parent=0 // loop_exit
    _

</llo_original>
